<compile_context>
chip_gen: v6e
topology: v6e:2x2x1
jax: 0.10.0
libtpu: 0.0.40
codegen_flags: <defaults>
</compile_context>

<pallas_src>
import functools

import jax
import jax.numpy as jnp
from jax import lax
from jax.experimental import pallas as pl
from jax.experimental.pallas import tpu as pltpu


# --------------------------------- Pallas kernel ---------------------------------

def _rrcnn_kernel(x_ref, w1_ref, b1_ref, wd1_ref, sf1_ref, wd2_ref, sf2_ref, o_ref,
                  *, t, h):
    """Whole RRCNN_block for a block of images; all intermediates stay on-chip."""
    f32 = jnp.float32
    rows, wc = o_ref.shape
    mxu_dt = w1_ref.dtype                        # MXU operand dtype (f32 or bf16)

    # Per-image row-boundary masks for the dy=0 / dy=2 output shifts.  Hoisted once
    # (JAX does not CSE broadcast_in_dim) and reused by all 2*(t+1) convs.
    row_in_img = lax.broadcasted_iota(jnp.int32, (rows, 1), 0) % h
    top_ok = row_in_img != 0                     # rows that have a row above them
    bot_ok = row_in_img != (h - 1)               # rows that have a row below them

    # Conv_1x1 via block-diagonal weight: one lane-dense MXU matmul + bias (f32 acc).
    x0 = jnp.dot(x_ref[...].astype(mxu_dt), w1_ref[...],
                 preferred_element_type=f32) + b1_ref[...]

    def conv_bn_relu(act, wd_ref, shift):
        # 3x3 "SAME" conv + BN + ReLU.  dx taps, x zero-padding and BN scale are folded
        # into the banded weight; the three dy taps are packed along the output axis,
        # so this is a single (rows, wc) @ (wc, 3*wc) MXU matmul.  The dy row shift is
        # applied to the OUTPUT with an XLU roll + boundary mask (no shift matmuls).
        y = jnp.dot(act.astype(mxu_dt), wd_ref[...], preferred_element_type=f32)
        acc = y[:, wc:2 * wc]                                          # dy = 1: no shift
        acc = acc + jnp.where(top_ok, pltpu.roll(y[:, :wc], 1, axis=0), 0.0)
        acc = acc + jnp.where(bot_ok, pltpu.roll(y[:, 2 * wc:], rows - 1, axis=0), 0.0)
        return jnp.maximum(acc + shift, 0.0)      # conv bias + BN pre-folded into shift

    def recurrent_block(z, wd_ref, sf_ref):
        shift = jnp.broadcast_to(sf_ref[...], z.shape)                 # hoisted broadcast
        x1 = conv_bn_relu(z, wd_ref, shift)                            # i == 0 branch
        for _ in range(t):                                             # x1 = conv(z + x1)
            x1 = conv_bn_relu(z + x1, wd_ref, shift)                   # recurrence add fused
        return x1

    r = recurrent_block(recurrent_block(x0, wd1_ref, sf1_ref), wd2_ref, sf2_ref)
    o_ref[...] = (x0 + r).astype(o_ref.dtype)                          # RRCNN residual fused


# ------------------------------- pallas_call wrapper ------------------------------

def _choose_images_per_block(n, h):
    # Grow the matmul M dimension (amortize MXU fill/drain and ~0.35us/step overhead)
    # while keeping >= 2 grid steps when n >= 2 so v7x megacore can shard the grid.
    if h % 8 != 0:
        return n                  # full-extent block is always a legal BlockSpec
    b = max(1, min(n, max(1, 256 // h)))
    while b > 1 and (n % b != 0 or n // b < 2):
        b -= 1
    return b


def rrcnn_block_apply(x_nchw, params, t=2, mxu_dtype=jnp.float32):
    n, c_in, h, w = x_nchw.shape
    c_out = params["conv1x1_w"].shape[1]
    wc = w * c_out
    f32 = jnp.float32
    eye = functools.partial(jnp.eye, dtype=f32)

    # Pad input channels so the input slab is lane-dense (W*C_in a multiple of 128
    # when cheaply possible) -> unmasked loads and a K-aligned 1x1 matmul.
    c_pad = c_in
    if (w * c_in) % 128 != 0:
        for cand in range(c_in + 1, 4 * c_in + 1):
            if (w * cand) % 128 == 0:
                c_pad = cand
                break

    # NCHW -> NHWC (+ channel zero-pad) -> 2-D slab: rows = (n, y), lanes = (x, channel).
    x_nhwc = jnp.transpose(x_nchw, (0, 2, 3, 1))
    if c_pad != c_in:
        x_nhwc = jnp.pad(x_nhwc, ((0, 0), (0, 0), (0, 0), (0, c_pad - c_in)))
    x2d = x_nhwc.reshape(n * h, w * c_pad)

    # 1x1 conv as a block-diagonal (W*Cpad, W*Cout) weight; bias tiled per lane (f32).
    w1x1 = params["conv1x1_w"]
    if c_pad != c_in:
        w1x1 = jnp.concatenate([w1x1, jnp.zeros((c_pad - c_in, c_out), f32)], axis=0)
    w1 = jnp.kron(eye(w), w1x1).astype(mxu_dtype)
    b1 = jnp.tile(params["conv1x1_b"], w)[None, :]

    def prep_rb(p):
        # Banded weight per dy: dx taps + zero x-padding folded via kron; BN scale is
        # folded into the output columns; the three dy slabs are concatenated along the
        # output axis -> one (W*C, 3*W*C) matmul operand per conv.
        wk = p["w"] * p["scale"][None, None, None, :]                  # (3,3,C,C) HWIO
        wd = [sum(jnp.kron(eye(w, k=-(dx - 1)), wk[dy, dx]) for dx in range(3))
              for dy in range(3)]
        wd_wide = jnp.concatenate(wd, axis=1).astype(mxu_dtype)        # (W*C, 3*W*C)
        shift = jnp.tile(p["shift"] + p["b"] * p["scale"], w)[None, :]  # bias folded, f32
        return wd_wide, shift

    wd1, sf1 = prep_rb(params["rb1"])
    wd2, sf2 = prep_rb(params["rb2"])

    b_imgs = _choose_images_per_block(n, h)
    bh = b_imgs * h

    kern = functools.partial(_rrcnn_kernel, t=t, h=h)
    out2d = pl.pallas_call(
        kern,
        out_shape=jax.ShapeDtypeStruct((n * h, wc), f32),
        grid=(n // b_imgs,),                                # block of images per grid step
        in_specs=[
            pl.BlockSpec((bh, w * c_pad), lambda i: (i, 0)),    # activation slab
            pl.BlockSpec((w * c_pad, wc), lambda i: (0, 0)),    # 1x1 block-diag weight
            pl.BlockSpec((1, wc), lambda i: (0, 0)),            # 1x1 bias row (f32)
            pl.BlockSpec((wc, 3 * wc), lambda i: (0, 0)),       # rb1 banded weights (3 dy packed)
            pl.BlockSpec((1, wc), lambda i: (0, 0)),            # rb1 BN shift (+bias, f32)
            pl.BlockSpec((wc, 3 * wc), lambda i: (0, 0)),       # rb2 banded weights
            pl.BlockSpec((1, wc), lambda i: (0, 0)),            # rb2 BN shift (+bias, f32)
        ],
        out_specs=pl.BlockSpec((bh, wc), lambda i: (i, 0)),
        compiler_params=pltpu.CompilerParams(
            dimension_semantics=("parallel",)),
    )(x2d, w1, b1, wd1, sf1, wd2, sf2)

    return jnp.transpose(out2d.reshape(n, h, w, c_out), (0, 3, 1, 2))   # NHWC -> NCHW


# ------------------------------- pure-JAX reference -------------------------------

def _ref_conv_bn_relu(z, p):
    y = lax.conv_general_dilated(z, p["w"], (1, 1), "SAME",
                                 dimension_numbers=("NHWC", "HWIO", "NHWC"))
    y = (y + p["b"]) * p["scale"] + p["shift"]
    return jnp.maximum(y, 0.0)


def rrcnn_ref(x_nchw, params, t=2):
    x = jnp.transpose(x_nchw, (0, 2, 3, 1))

    def rec(z, p):
        z1 = _ref_conv_bn_relu(z, p)
        for _ in range(t):
            z1 = _ref_conv_bn_relu(z + z1, p)
        return z1

    x0 = jnp.einsum("nhwc,cd->nhwd", x, params["conv1x1_w"]) + params["conv1x1_b"]
    r = rec(rec(x0, params["rb1"]), params["rb2"])
    return jnp.transpose(x0 + r, (0, 3, 1, 2))


# --------------------------------- parameter init ---------------------------------

def init_params(key, ch_in, ch_out, eps=1e-5):
    ks = jax.random.split(key, 14)

    def make_bn(kg, kb, km, kv):
        gamma = 1.0 + 0.1 * jax.random.normal(kg, (ch_out,), jnp.float32)
        beta = 0.1 * jax.random.normal(kb, (ch_out,), jnp.float32)
        mean = 0.1 * jax.random.normal(km, (ch_out,), jnp.float32)
        var = 1.0 + 0.1 * jax.random.uniform(kv, (ch_out,), jnp.float32)
        scale = gamma / jnp.sqrt(var + eps)
        shift = beta - mean * scale
        return scale, shift

    def make_rb(k0, k1, kg, kb, km, kv):
        scale, shift = make_bn(kg, kb, km, kv)
        return {
            "w": 0.15 * jax.random.normal(k0, (3, 3, ch_out, ch_out), jnp.float32),
            "b": 0.05 * jax.random.normal(k1, (ch_out,), jnp.float32),
            "scale": scale,
            "shift": shift,
        }

    return {
        "conv1x1_w": 0.3 * jax.random.normal(ks[0], (ch_in, ch_out), jnp.float32),
        "conv1x1_b": 0.05 * jax.random.normal(ks[1], (ch_out,), jnp.float32),
        "rb1": make_rb(*ks[2:8]),
        "rb2": make_rb(*ks[8:14]),
    }


# -------------------------------------- main ---------------------------------------

if __name__ == "__main__":
    N, C_IN, C_OUT, H, W, T = 2, 4, 8, 16, 16, 2
    key = jax.random.PRNGKey(0)
    kx, kp = jax.random.split(key)
    x = jax.random.normal(kx, (N, C_IN, H, W), jnp.float32)   # PyTorch-style NCHW input
    params = init_params(kp, C_IN, C_OUT)

    ref = rrcnn_ref(x, params, t=T)

    # Exact path: f32 MXU operands, must match the pure-JAX reference tightly.
    fn = jax.jit(functools.partial(rrcnn_block_apply, t=T))
    out = jax.block_until_ready(fn(x, params))
    assert out.shape == (N, C_OUT, H, W), out.shape
    err = float(jnp.max(jnp.abs(out - ref)))
    if not bool(jnp.allclose(out, ref, atol=1e-3, rtol=1e-3)):
        raise AssertionError(f"Pallas (f32) output mismatch vs JAX reference, max abs err {err}")

    # Perf option from the review: bf16 MXU operands (weights + matmul LHS) with f32
    # accumulation, recurrence adds, BN epilogue and residual.  The 2*(t+1) chained
    # convs compound operand rounding, so this path gets only a loose sanity bound.
    fn_bf16 = jax.jit(functools.partial(rrcnn_block_apply, t=T, mxu_dtype=jnp.bfloat16))
    out_bf16 = jax.block_until_ready(fn_bf16(x, params))
    err_bf16 = float(jnp.max(jnp.abs(out_bf16 - ref)))
    if err_bf16 > 0.25 * (1.0 + float(jnp.max(jnp.abs(ref)))):
        raise AssertionError(f"Pallas (bf16) sanity check failed, max abs err {err_bf16}")

    print("KERNEL_OK")
</pallas_src>

<mosaic_0001>
module attributes {stable_mosaic.version = 11 : i64} {
  func.func @_rrcnn_kernel(%arg0: i32, %arg1: memref<16x128xf32, #tpu.memory_space<vmem>>, %arg2: memref<128x128xf32, #tpu.memory_space<vmem>>, %arg3: memref<1x128xf32, #tpu.memory_space<vmem>>, %arg4: memref<128x384xf32, #tpu.memory_space<vmem>>, %arg5: memref<1x128xf32, #tpu.memory_space<vmem>>, %arg6: memref<128x384xf32, #tpu.memory_space<vmem>>, %arg7: memref<1x128xf32, #tpu.memory_space<vmem>>, %arg8: memref<16x128xf32, #tpu.memory_space<vmem>>) attributes {dimension_semantics = [#tpu.dimension_semantics<parallel>], iteration_bounds = array<i64: 2>, scalar_prefetch = 0 : i64, scratch_operands = 0 : i64, tpu.core_type = #tpu.core_type<tc>, window_params = [{transform_indices = @transform_0, window_bounds = array<i64: 16, 128>}, {pipeline_mode = #tpu.pipeline_mode<synchronous>, transform_indices = @transform_1, window_bounds = array<i64: 128, 128>}, {pipeline_mode = #tpu.pipeline_mode<synchronous>, transform_indices = @transform_2, window_bounds = array<i64: 1, 128>}, {pipeline_mode = #tpu.pipeline_mode<synchronous>, transform_indices = @transform_3, window_bounds = array<i64: 128, 384>}, {pipeline_mode = #tpu.pipeline_mode<synchronous>, transform_indices = @transform_4, window_bounds = array<i64: 1, 128>}, {pipeline_mode = #tpu.pipeline_mode<synchronous>, transform_indices = @transform_5, window_bounds = array<i64: 128, 384>}, {pipeline_mode = #tpu.pipeline_mode<synchronous>, transform_indices = @transform_6, window_bounds = array<i64: 1, 128>}, {transform_indices = @transform_7, window_bounds = array<i64: 16, 128>}]} {
    %0 = tpu.iota {dimensions = array<i32: 0>} : vector<16x1xi32>
    %c16_i32 = arith.constant 16 : i32
    %c0_i32 = arith.constant 0 : i32
    %1 = arith.cmpi eq, %c16_i32, %c0_i32 : i32
    %c1_i32 = arith.constant 1 : i32
    %2 = arith.select %1, %c1_i32, %c16_i32 : i32
    %3 = vector.broadcast %2 : i32 to vector<16x1xi32>
    %4 = arith.remsi %0, %3 : vector<16x1xi32>
    %c0_i32_0 = arith.constant 0 : i32
    %5 = vector.broadcast %c0_i32_0 : i32 to vector<16x1xi32>
    %6 = arith.cmpi ne, %4, %5 : vector<16x1xi32>
    %c0_i32_1 = arith.constant 0 : i32
    %7 = vector.broadcast %c0_i32_1 : i32 to vector<16x1xi32>
    %8 = arith.cmpi slt, %4, %7 : vector<16x1xi32>
    %c0_i32_2 = arith.constant 0 : i32
    %9 = arith.cmpi slt, %2, %c0_i32_2 : i32
    %10 = vector.broadcast %9 : i1 to vector<16x1xi1>
    %11 = vector.broadcast %10 : vector<16x1xi1> to vector<16x1xi1>
    %12 = arith.xori %8, %11 : vector<16x1xi1>
    %13 = arith.andi %12, %6 : vector<16x1xi1>
    %14 = vector.broadcast %2 : i32 to vector<16x1xi32>
    %15 = arith.addi %4, %14 : vector<16x1xi32>
    %16 = arith.select %13, %15, %4 : vector<16x1xi1>, vector<16x1xi32>
    %c0_i32_3 = arith.constant 0 : i32
    %17 = vector.broadcast %c0_i32_3 : i32 to vector<16x1xi32>
    %18 = arith.cmpi ne, %16, %17 : vector<16x1xi32>
    %c15_i32 = arith.constant 15 : i32
    %19 = vector.broadcast %c15_i32 : i32 to vector<16x1xi32>
    %20 = arith.cmpi ne, %16, %19 : vector<16x1xi32>
    %c0 = arith.constant 0 : index
    %c0_4 = arith.constant 0 : index
    %21 = vector.load %arg1[%c0, %c0_4] : memref<16x128xf32, #tpu.memory_space<vmem>>, vector<16x128xf32>
    %c0_5 = arith.constant 0 : index
    %c0_6 = arith.constant 0 : index
    %22 = vector.load %arg2[%c0_5, %c0_6] : memref<128x128xf32, #tpu.memory_space<vmem>>, vector<128x128xf32>
    %cst = arith.constant dense<0.000000e+00> : vector<16x128xf32>
    %23 = tpu.matmul %21, %22, %cst {dimension_numbers = #tpu.dot_dimension_numbers<[1], [0], [0], [1], [0, 0, 1, 1], [], []>} : vector<16x128xf32>, vector<128x128xf32>, vector<16x128xf32> -> vector<16x128xf32>
    %c0_7 = arith.constant 0 : index
    %c0_8 = arith.constant 0 : index
    %24 = vector.load %arg3[%c0_7, %c0_8] : memref<1x128xf32, #tpu.memory_space<vmem>>, vector<1x128xf32>
    %25 = vector.broadcast %24 : vector<1x128xf32> to vector<16x128xf32>
    %26 = arith.addf %23, %25 : vector<16x128xf32>
    %c0_9 = arith.constant 0 : index
    %c0_10 = arith.constant 0 : index
    %27 = vector.load %arg5[%c0_9, %c0_10] : memref<1x128xf32, #tpu.memory_space<vmem>>, vector<1x128xf32>
    %28 = vector.shape_cast %27 : vector<1x128xf32> to vector<1x128xf32>
    %29 = vector.broadcast %28 : vector<1x128xf32> to vector<16x128xf32>
    %c0_11 = arith.constant 0 : index
    %c0_12 = arith.constant 0 : index
    %30 = vector.load %arg4[%c0_11, %c0_12] : memref<128x384xf32, #tpu.memory_space<vmem>>, vector<128x384xf32>
    %cst_13 = arith.constant dense<0.000000e+00> : vector<16x384xf32>
    %31 = tpu.matmul %26, %30, %cst_13 {dimension_numbers = #tpu.dot_dimension_numbers<[1], [0], [0], [1], [0, 0, 1, 1], [], []>} : vector<16x128xf32>, vector<128x384xf32>, vector<16x384xf32> -> vector<16x384xf32>
    %32 = vector.extract_strided_slice %31 {offsets = [0, 128], sizes = [16, 128], strides = [1, 1]} : vector<16x384xf32> to vector<16x128xf32>
    %33 = vector.extract_strided_slice %31 {offsets = [0, 0], sizes = [16, 128], strides = [1, 1]} : vector<16x384xf32> to vector<16x128xf32>
    %c1_i32_14 = arith.constant 1 : i32
    %34 = tpu.dynamic_rotate %33 by %c1_i32_14 dim 0 : vector<16x128xf32>, i32 -> vector<16x128xf32>
    %cst_15 = arith.constant 0.000000e+00 : f32
    %35 = vector.shape_cast %18 : vector<16x1xi1> to vector<16x1xi1>
    %36 = vector.broadcast %35 : vector<16x1xi1> to vector<16x128xi1>
    %37 = vector.broadcast %cst_15 : f32 to vector<16x128xf32>
    %38 = arith.select %36, %34, %37 : vector<16x128xi1>, vector<16x128xf32>
    %39 = arith.addf %32, %38 : vector<16x128xf32>
    %40 = vector.extract_strided_slice %31 {offsets = [0, 256], sizes = [16, 128], strides = [1, 1]} : vector<16x384xf32> to vector<16x128xf32>
    %c15_i32_16 = arith.constant 15 : i32
    %41 = tpu.dynamic_rotate %40 by %c15_i32_16 dim 0 : vector<16x128xf32>, i32 -> vector<16x128xf32>
    %cst_17 = arith.constant 0.000000e+00 : f32
    %42 = vector.shape_cast %20 : vector<16x1xi1> to vector<16x1xi1>
    %43 = vector.broadcast %42 : vector<16x1xi1> to vector<16x128xi1>
    %44 = vector.broadcast %cst_17 : f32 to vector<16x128xf32>
    %45 = arith.select %43, %41, %44 : vector<16x128xi1>, vector<16x128xf32>
    %46 = arith.addf %39, %45 : vector<16x128xf32>
    %47 = arith.addf %46, %29 : vector<16x128xf32>
    %cst_18 = arith.constant 0.000000e+00 : f32
    %48 = vector.broadcast %cst_18 : f32 to vector<16x128xf32>
    %49 = arith.maximumf %47, %48 : vector<16x128xf32>
    %50 = arith.addf %26, %49 : vector<16x128xf32>
    %c0_19 = arith.constant 0 : index
    %c0_20 = arith.constant 0 : index
    %51 = vector.load %arg4[%c0_19, %c0_20] : memref<128x384xf32, #tpu.memory_space<vmem>>, vector<128x384xf32>
    %cst_21 = arith.constant dense<0.000000e+00> : vector<16x384xf32>
    %52 = tpu.matmul %50, %51, %cst_21 {dimension_numbers = #tpu.dot_dimension_numbers<[1], [0], [0], [1], [0, 0, 1, 1], [], []>} : vector<16x128xf32>, vector<128x384xf32>, vector<16x384xf32> -> vector<16x384xf32>
    %53 = vector.extract_strided_slice %52 {offsets = [0, 128], sizes = [16, 128], strides = [1, 1]} : vector<16x384xf32> to vector<16x128xf32>
    %54 = vector.extract_strided_slice %52 {offsets = [0, 0], sizes = [16, 128], strides = [1, 1]} : vector<16x384xf32> to vector<16x128xf32>
    %c1_i32_22 = arith.constant 1 : i32
    %55 = tpu.dynamic_rotate %54 by %c1_i32_22 dim 0 : vector<16x128xf32>, i32 -> vector<16x128xf32>
    %cst_23 = arith.constant 0.000000e+00 : f32
    %56 = vector.shape_cast %18 : vector<16x1xi1> to vector<16x1xi1>
    %57 = vector.broadcast %56 : vector<16x1xi1> to vector<16x128xi1>
    %58 = vector.broadcast %cst_23 : f32 to vector<16x128xf32>
    %59 = arith.select %57, %55, %58 : vector<16x128xi1>, vector<16x128xf32>
    %60 = arith.addf %53, %59 : vector<16x128xf32>
    %61 = vector.extract_strided_slice %52 {offsets = [0, 256], sizes = [16, 128], strides = [1, 1]} : vector<16x384xf32> to vector<16x128xf32>
    %c15_i32_24 = arith.constant 15 : i32
    %62 = tpu.dynamic_rotate %61 by %c15_i32_24 dim 0 : vector<16x128xf32>, i32 -> vector<16x128xf32>
    %cst_25 = arith.constant 0.000000e+00 : f32
    %63 = vector.shape_cast %20 : vector<16x1xi1> to vector<16x1xi1>
    %64 = vector.broadcast %63 : vector<16x1xi1> to vector<16x128xi1>
    %65 = vector.broadcast %cst_25 : f32 to vector<16x128xf32>
    %66 = arith.select %64, %62, %65 : vector<16x128xi1>, vector<16x128xf32>
    %67 = arith.addf %60, %66 : vector<16x128xf32>
    %68 = arith.addf %67, %29 : vector<16x128xf32>
    %cst_26 = arith.constant 0.000000e+00 : f32
    %69 = vector.broadcast %cst_26 : f32 to vector<16x128xf32>
    %70 = arith.maximumf %68, %69 : vector<16x128xf32>
    %71 = arith.addf %26, %70 : vector<16x128xf32>
    %c0_27 = arith.constant 0 : index
    %c0_28 = arith.constant 0 : index
    %72 = vector.load %arg4[%c0_27, %c0_28] : memref<128x384xf32, #tpu.memory_space<vmem>>, vector<128x384xf32>
    %cst_29 = arith.constant dense<0.000000e+00> : vector<16x384xf32>
    %73 = tpu.matmul %71, %72, %cst_29 {dimension_numbers = #tpu.dot_dimension_numbers<[1], [0], [0], [1], [0, 0, 1, 1], [], []>} : vector<16x128xf32>, vector<128x384xf32>, vector<16x384xf32> -> vector<16x384xf32>
    %74 = vector.extract_strided_slice %73 {offsets = [0, 128], sizes = [16, 128], strides = [1, 1]} : vector<16x384xf32> to vector<16x128xf32>
    %75 = vector.extract_strided_slice %73 {offsets = [0, 0], sizes = [16, 128], strides = [1, 1]} : vector<16x384xf32> to vector<16x128xf32>
    %c1_i32_30 = arith.constant 1 : i32
    %76 = tpu.dynamic_rotate %75 by %c1_i32_30 dim 0 : vector<16x128xf32>, i32 -> vector<16x128xf32>
    %cst_31 = arith.constant 0.000000e+00 : f32
    %77 = vector.shape_cast %18 : vector<16x1xi1> to vector<16x1xi1>
    %78 = vector.broadcast %77 : vector<16x1xi1> to vector<16x128xi1>
    %79 = vector.broadcast %cst_31 : f32 to vector<16x128xf32>
    %80 = arith.select %78, %76, %79 : vector<16x128xi1>, vector<16x128xf32>
    %81 = arith.addf %74, %80 : vector<16x128xf32>
    %82 = vector.extract_strided_slice %73 {offsets = [0, 256], sizes = [16, 128], strides = [1, 1]} : vector<16x384xf32> to vector<16x128xf32>
    %c15_i32_32 = arith.constant 15 : i32
    %83 = tpu.dynamic_rotate %82 by %c15_i32_32 dim 0 : vector<16x128xf32>, i32 -> vector<16x128xf32>
    %cst_33 = arith.constant 0.000000e+00 : f32
    %84 = vector.shape_cast %20 : vector<16x1xi1> to vector<16x1xi1>
    %85 = vector.broadcast %84 : vector<16x1xi1> to vector<16x128xi1>
    %86 = vector.broadcast %cst_33 : f32 to vector<16x128xf32>
    %87 = arith.select %85, %83, %86 : vector<16x128xi1>, vector<16x128xf32>
    %88 = arith.addf %81, %87 : vector<16x128xf32>
    %89 = arith.addf %88, %29 : vector<16x128xf32>
    %cst_34 = arith.constant 0.000000e+00 : f32
    %90 = vector.broadcast %cst_34 : f32 to vector<16x128xf32>
    %91 = arith.maximumf %89, %90 : vector<16x128xf32>
    %c0_35 = arith.constant 0 : index
    %c0_36 = arith.constant 0 : index
    %92 = vector.load %arg7[%c0_35, %c0_36] : memref<1x128xf32, #tpu.memory_space<vmem>>, vector<1x128xf32>
    %93 = vector.shape_cast %92 : vector<1x128xf32> to vector<1x128xf32>
    %94 = vector.broadcast %93 : vector<1x128xf32> to vector<16x128xf32>
    %c0_37 = arith.constant 0 : index
    %c0_38 = arith.constant 0 : index
    %95 = vector.load %arg6[%c0_37, %c0_38] : memref<128x384xf32, #tpu.memory_space<vmem>>, vector<128x384xf32>
    %cst_39 = arith.constant dense<0.000000e+00> : vector<16x384xf32>
    %96 = tpu.matmul %91, %95, %cst_39 {dimension_numbers = #tpu.dot_dimension_numbers<[1], [0], [0], [1], [0, 0, 1, 1], [], []>} : vector<16x128xf32>, vector<128x384xf32>, vector<16x384xf32> -> vector<16x384xf32>
    %97 = vector.extract_strided_slice %96 {offsets = [0, 128], sizes = [16, 128], strides = [1, 1]} : vector<16x384xf32> to vector<16x128xf32>
    %98 = vector.extract_strided_slice %96 {offsets = [0, 0], sizes = [16, 128], strides = [1, 1]} : vector<16x384xf32> to vector<16x128xf32>
    %c1_i32_40 = arith.constant 1 : i32
    %99 = tpu.dynamic_rotate %98 by %c1_i32_40 dim 0 : vector<16x128xf32>, i32 -> vector<16x128xf32>
    %cst_41 = arith.constant 0.000000e+00 : f32
    %100 = vector.shape_cast %18 : vector<16x1xi1> to vector<16x1xi1>
    %101 = vector.broadcast %100 : vector<16x1xi1> to vector<16x128xi1>
    %102 = vector.broadcast %cst_41 : f32 to vector<16x128xf32>
    %103 = arith.select %101, %99, %102 : vector<16x128xi1>, vector<16x128xf32>
    %104 = arith.addf %97, %103 : vector<16x128xf32>
    %105 = vector.extract_strided_slice %96 {offsets = [0, 256], sizes = [16, 128], strides = [1, 1]} : vector<16x384xf32> to vector<16x128xf32>
    %c15_i32_42 = arith.constant 15 : i32
    %106 = tpu.dynamic_rotate %105 by %c15_i32_42 dim 0 : vector<16x128xf32>, i32 -> vector<16x128xf32>
    %cst_43 = arith.constant 0.000000e+00 : f32
    %107 = vector.shape_cast %20 : vector<16x1xi1> to vector<16x1xi1>
    %108 = vector.broadcast %107 : vector<16x1xi1> to vector<16x128xi1>
    %109 = vector.broadcast %cst_43 : f32 to vector<16x128xf32>
    %110 = arith.select %108, %106, %109 : vector<16x128xi1>, vector<16x128xf32>
    %111 = arith.addf %104, %110 : vector<16x128xf32>
    %112 = arith.addf %111, %94 : vector<16x128xf32>
    %cst_44 = arith.constant 0.000000e+00 : f32
    %113 = vector.broadcast %cst_44 : f32 to vector<16x128xf32>
    %114 = arith.maximumf %112, %113 : vector<16x128xf32>
    %115 = arith.addf %91, %114 : vector<16x128xf32>
    %c0_45 = arith.constant 0 : index
    %c0_46 = arith.constant 0 : index
    %116 = vector.load %arg6[%c0_45, %c0_46] : memref<128x384xf32, #tpu.memory_space<vmem>>, vector<128x384xf32>
    %cst_47 = arith.constant dense<0.000000e+00> : vector<16x384xf32>
    %117 = tpu.matmul %115, %116, %cst_47 {dimension_numbers = #tpu.dot_dimension_numbers<[1], [0], [0], [1], [0, 0, 1, 1], [], []>} : vector<16x128xf32>, vector<128x384xf32>, vector<16x384xf32> -> vector<16x384xf32>
    %118 = vector.extract_strided_slice %117 {offsets = [0, 128], sizes = [16, 128], strides = [1, 1]} : vector<16x384xf32> to vector<16x128xf32>
    %119 = vector.extract_strided_slice %117 {offsets = [0, 0], sizes = [16, 128], strides = [1, 1]} : vector<16x384xf32> to vector<16x128xf32>
    %c1_i32_48 = arith.constant 1 : i32
    %120 = tpu.dynamic_rotate %119 by %c1_i32_48 dim 0 : vector<16x128xf32>, i32 -> vector<16x128xf32>
    %cst_49 = arith.constant 0.000000e+00 : f32
    %121 = vector.shape_cast %18 : vector<16x1xi1> to vector<16x1xi1>
    %122 = vector.broadcast %121 : vector<16x1xi1> to vector<16x128xi1>
    %123 = vector.broadcast %cst_49 : f32 to vector<16x128xf32>
    %124 = arith.select %122, %120, %123 : vector<16x128xi1>, vector<16x128xf32>
    %125 = arith.addf %118, %124 : vector<16x128xf32>
    %126 = vector.extract_strided_slice %117 {offsets = [0, 256], sizes = [16, 128], strides = [1, 1]} : vector<16x384xf32> to vector<16x128xf32>
    %c15_i32_50 = arith.constant 15 : i32
    %127 = tpu.dynamic_rotate %126 by %c15_i32_50 dim 0 : vector<16x128xf32>, i32 -> vector<16x128xf32>
    %cst_51 = arith.constant 0.000000e+00 : f32
    %128 = vector.shape_cast %20 : vector<16x1xi1> to vector<16x1xi1>
    %129 = vector.broadcast %128 : vector<16x1xi1> to vector<16x128xi1>
    %130 = vector.broadcast %cst_51 : f32 to vector<16x128xf32>
    %131 = arith.select %129, %127, %130 : vector<16x128xi1>, vector<16x128xf32>
    %132 = arith.addf %125, %131 : vector<16x128xf32>
    %133 = arith.addf %132, %94 : vector<16x128xf32>
    %cst_52 = arith.constant 0.000000e+00 : f32
    %134 = vector.broadcast %cst_52 : f32 to vector<16x128xf32>
    %135 = arith.maximumf %133, %134 : vector<16x128xf32>
    %136 = arith.addf %91, %135 : vector<16x128xf32>
    %c0_53 = arith.constant 0 : index
    %c0_54 = arith.constant 0 : index
    %137 = vector.load %arg6[%c0_53, %c0_54] : memref<128x384xf32, #tpu.memory_space<vmem>>, vector<128x384xf32>
    %cst_55 = arith.constant dense<0.000000e+00> : vector<16x384xf32>
    %138 = tpu.matmul %136, %137, %cst_55 {dimension_numbers = #tpu.dot_dimension_numbers<[1], [0], [0], [1], [0, 0, 1, 1], [], []>} : vector<16x128xf32>, vector<128x384xf32>, vector<16x384xf32> -> vector<16x384xf32>
    %139 = vector.extract_strided_slice %138 {offsets = [0, 128], sizes = [16, 128], strides = [1, 1]} : vector<16x384xf32> to vector<16x128xf32>
    %140 = vector.extract_strided_slice %138 {offsets = [0, 0], sizes = [16, 128], strides = [1, 1]} : vector<16x384xf32> to vector<16x128xf32>
    %c1_i32_56 = arith.constant 1 : i32
    %141 = tpu.dynamic_rotate %140 by %c1_i32_56 dim 0 : vector<16x128xf32>, i32 -> vector<16x128xf32>
    %cst_57 = arith.constant 0.000000e+00 : f32
    %142 = vector.shape_cast %18 : vector<16x1xi1> to vector<16x1xi1>
    %143 = vector.broadcast %142 : vector<16x1xi1> to vector<16x128xi1>
    %144 = vector.broadcast %cst_57 : f32 to vector<16x128xf32>
    %145 = arith.select %143, %141, %144 : vector<16x128xi1>, vector<16x128xf32>
    %146 = arith.addf %139, %145 : vector<16x128xf32>
    %147 = vector.extract_strided_slice %138 {offsets = [0, 256], sizes = [16, 128], strides = [1, 1]} : vector<16x384xf32> to vector<16x128xf32>
    %c15_i32_58 = arith.constant 15 : i32
    %148 = tpu.dynamic_rotate %147 by %c15_i32_58 dim 0 : vector<16x128xf32>, i32 -> vector<16x128xf32>
    %cst_59 = arith.constant 0.000000e+00 : f32
    %149 = vector.shape_cast %20 : vector<16x1xi1> to vector<16x1xi1>
    %150 = vector.broadcast %149 : vector<16x1xi1> to vector<16x128xi1>
    %151 = vector.broadcast %cst_59 : f32 to vector<16x128xf32>
    %152 = arith.select %150, %148, %151 : vector<16x128xi1>, vector<16x128xf32>
    %153 = arith.addf %146, %152 : vector<16x128xf32>
    %154 = arith.addf %153, %94 : vector<16x128xf32>
    %cst_60 = arith.constant 0.000000e+00 : f32
    %155 = vector.broadcast %cst_60 : f32 to vector<16x128xf32>
    %156 = arith.maximumf %154, %155 : vector<16x128xf32>
    %157 = arith.addf %26, %156 : vector<16x128xf32>
    %c0_61 = arith.constant 0 : index
    %c0_62 = arith.constant 0 : index
    %158 = vector.load %arg8[%c0_61, %c0_62] : memref<16x128xf32, #tpu.memory_space<vmem>>, vector<16x128xf32>
    tpu.vector_store %arg8[%c0_61, %c0_62], %157 {strides = array<i32>} : memref<16x128xf32, #tpu.memory_space<vmem>>, vector<16x128xf32>,
    return
  }
  func.func @transform_0(%arg0: i32) -> (i32, i32) {
    %c0_i32 = arith.constant 0 : i32
    %c0_i32_0 = arith.constant 0 : i32
    return %arg0, %c0_i32 : i32, i32
  }
  func.func @transform_1(%arg0: i32) -> (i32, i32) {
    %c0_i32 = arith.constant 0 : i32
    %c0_i32_0 = arith.constant 0 : i32
    %c0_i32_1 = arith.constant 0 : i32
    return %c0_i32, %c0_i32_0 : i32, i32
  }
  func.func @transform_2(%arg0: i32) -> (i32, i32) {
    %c0_i32 = arith.constant 0 : i32
    %c0_i32_0 = arith.constant 0 : i32
    %c0_i32_1 = arith.constant 0 : i32
    return %c0_i32, %c0_i32_0 : i32, i32
  }
  func.func @transform_3(%arg0: i32) -> (i32, i32) {
    %c0_i32 = arith.constant 0 : i32
    %c0_i32_0 = arith.constant 0 : i32
    %c0_i32_1 = arith.constant 0 : i32
    return %c0_i32, %c0_i32_0 : i32, i32
  }
  func.func @transform_4(%arg0: i32) -> (i32, i32) {
    %c0_i32 = arith.constant 0 : i32
    %c0_i32_0 = arith.constant 0 : i32
    %c0_i32_1 = arith.constant 0 : i32
    return %c0_i32, %c0_i32_0 : i32, i32
  }
  func.func @transform_5(%arg0: i32) -> (i32, i32) {
    %c0_i32 = arith.constant 0 : i32
    %c0_i32_0 = arith.constant 0 : i32
    %c0_i32_1 = arith.constant 0 : i32
    return %c0_i32, %c0_i32_0 : i32, i32
  }
  func.func @transform_6(%arg0: i32) -> (i32, i32) {
    %c0_i32 = arith.constant 0 : i32
    %c0_i32_0 = arith.constant 0 : i32
    %c0_i32_1 = arith.constant 0 : i32
    return %c0_i32, %c0_i32_0 : i32, i32
  }
  func.func @transform_7(%arg0: i32) -> (i32, i32) {
    %c0_i32 = arith.constant 0 : i32
    %c0_i32_0 = arith.constant 0 : i32
    return %arg0, %c0_i32 : i32, i32
  }
}

</mosaic_0001>

<llo_original>
// kernel: tile.23
$region0: #{tile.23}
  #allocation0 [shape = 's32[1]{0}', space=sflag, size = 0x4, scoped, tag = 'scoped memory for tile.23']
  %s0 = inlined_call_operand.vmem [shape: f32[8], index: 0, kind: input, shape index: {}]
  %s1 = inlined_call_operand.vmem [shape: f32[16,8], index: 1, kind: output, shape index: {}]
  // Predicated region
  $region2: #{tile.23} parent=0 // pred_check
    _
  $region3: #{tile.23} parent=0 // pred_check_branch
    %3 = sbr.rel (0) target = $region5
  $region4: #{tile.23} parent=0 // pred_region
    _
  $region5: #{tile.23} parent=0 // pred_fallthru
    _
  %v4 = vld [vmem:[%s0] ss:$0 sm:$0xff]
  %5 = vst [vmem:[%s1] sm:$0xff] %v4
  %s6 = scalar_lea.vmem %s1, 8
  %7 = vst [vmem:[%s6] sm:$0xff] %v4

// kernel: tile.24
$region0: #{tile.24}
  %s0 = inlined_call_operand.vmem [shape: f32[16,8], index: 0, kind: input, shape index: {}]
  %s1 = inlined_call_operand.vmem [shape: f32[1,128], index: 1, kind: output, shape index: {}]
  $region1: #{tile.24} parent=0
    #allocation0 [shape = 'u8[4096]{0}', space=vmem, size = 0x1000, scoped, tag = 'scoped mem for output reshape']
    %v2 = vld [vmem:[%s0] sm:$0x1]
    %vm3 = vcmask 64512
    %4 = vst.msk [vmem:[#allocation0] sm:$0x1] %vm3, %v2
    %s5 = scalar_lea.vmem %s0, 15
    %v6 = vld [vmem:[%s5] sm:$0x1]
    %7 = vrot.lane.b32.xlu0 %v6, 120
    %v8 = vpop.permute.xlu0 %7
    %vm9 = vcmask 1048512
    %10 = vst.msk [vmem:[#allocation0] sm:$0x1] %vm9, %v8
    %s11 = scalar_lea.vmem %s0, 14
    %v12 = vld [vmem:[%s11] sm:$0x1]
    %13 = vrot.lane.b32.xlu0 %v12, 112
    %v14 = vpop.permute.xlu0 %13
    %vm15 = vcmask 982912
    %16 = vst.msk [vmem:[#allocation0] sm:$0x1] %vm15, %v14
    %s17 = scalar_lea.vmem %s0, 13
    %v18 = vld [vmem:[%s17] sm:$0x1]
    %19 = vrot.lane.b32.xlu0 %v18, 104
    %v20 = vpop.permute.xlu0 %19
    %vm21 = vcmask 917312
    %22 = vst.msk [vmem:[#allocation0] sm:$0x1] %vm21, %v20
    %s23 = scalar_lea.vmem %s0, 12
    %v24 = vld [vmem:[%s23] sm:$0x1]
    %25 = vrot.lane.b32.xlu0 %v24, 96
    %v26 = vpop.permute.xlu0 %25
    %vm27 = vcmask 851712
    %28 = vst.msk [vmem:[#allocation0] sm:$0x1] %vm27, %v26
    %s29 = scalar_lea.vmem %s0, 11
    %v30 = vld [vmem:[%s29] sm:$0x1]
    %31 = vrot.lane.b32.xlu0 %v30, 88
    %v32 = vpop.permute.xlu0 %31
    %vm33 = vcmask 786112
    %34 = vst.msk [vmem:[#allocation0] sm:$0x1] %vm33, %v32
    %s35 = scalar_lea.vmem %s0, 10
    %v36 = vld [vmem:[%s35] sm:$0x1]
    %37 = vrot.lane.b32.xlu0 %v36, 80
    %v38 = vpop.permute.xlu0 %37
    %vm39 = vcmask 720512
    %40 = vst.msk [vmem:[#allocation0] sm:$0x1] %vm39, %v38
    %s41 = scalar_lea.vmem %s0, 9
    %v42 = vld [vmem:[%s41] sm:$0x1]
    %43 = vrot.lane.b32.xlu0 %v42, 72
    %v44 = vpop.permute.xlu0 %43
    %vm45 = vcmask 654912
    %46 = vst.msk [vmem:[#allocation0] sm:$0x1] %vm45, %v44
    %s47 = scalar_lea.vmem %s0, 8
    %v48 = vld [vmem:[%s47] sm:$0x1]
    %49 = vrot.lane.b32.xlu0 %v48, 64
    %v50 = vpop.permute.xlu0 %49
    %vm51 = vcmask 589312
    %52 = vst.msk [vmem:[#allocation0] sm:$0x1] %vm51, %v50
    %s53 = scalar_lea.vmem %s0, 7
    %v54 = vld [vmem:[%s53] sm:$0x1]
    %55 = vrot.lane.b32.xlu0 %v54, 56
    %v56 = vpop.permute.xlu0 %55
    %vm57 = vcmask 523712
    %58 = vst.msk [vmem:[#allocation0] sm:$0x1] %vm57, %v56
    %s59 = scalar_lea.vmem %s0, 6
    %v60 = vld [vmem:[%s59] sm:$0x1]
    %61 = vrot.lane.b32.xlu0 %v60, 48
    %v62 = vpop.permute.xlu0 %61
    %vm63 = vcmask 458112
    %64 = vst.msk [vmem:[#allocation0] sm:$0x1] %vm63, %v62
    %s65 = scalar_lea.vmem %s0, 5
    %v66 = vld [vmem:[%s65] sm:$0x1]
    %67 = vrot.lane.b32.xlu0 %v66, 40
    %v68 = vpop.permute.xlu0 %67
    %vm69 = vcmask 392512
    %70 = vst.msk [vmem:[#allocation0] sm:$0x1] %vm69, %v68
    %s71 = scalar_lea.vmem %s0, 4
    %v72 = vld [vmem:[%s71] sm:$0x1]
    %73 = vrot.lane.b32.xlu0 %v72, 32
    %v74 = vpop.permute.xlu0 %73
    %vm75 = vcmask 326912
    %76 = vst.msk [vmem:[#allocation0] sm:$0x1] %vm75, %v74
    %s77 = scalar_lea.vmem %s0, 3
    %v78 = vld [vmem:[%s77] sm:$0x1]
    %79 = vrot.lane.b32.xlu0 %v78, 24
    %v80 = vpop.permute.xlu0 %79
    %vm81 = vcmask 261312
    %82 = vst.msk [vmem:[#allocation0] sm:$0x1] %vm81, %v80
    %s83 = scalar_lea.vmem %s0, 2
    %v84 = vld [vmem:[%s83] sm:$0x1]
    %85 = vrot.lane.b32.xlu0 %v84, 16
    %v86 = vpop.permute.xlu0 %85
    %vm87 = vcmask 195712
    %88 = vst.msk [vmem:[#allocation0] sm:$0x1] %vm87, %v86
    %s89 = scalar_lea.vmem %s0, 1
    %v90 = vld [vmem:[%s89] sm:$0x1]
    %91 = vrot.lane.b32.xlu0 %v90, 8
    %v92 = vpop.permute.xlu0 %91
    %vm93 = vcmask 130112
    %94 = vst.msk [vmem:[#allocation0] sm:$0x1] %vm93, %v92
    %s96 = sshll.u32 1, 1
    %s97 = ssub.s32 %s96, 1
    %v99 = vld [vmem:[#allocation0] sm:%s97]
    %s100 = sshll.u32 1, 1
    %s101 = ssub.s32 %s100, 1
    %102 = vst [vmem:[%s1] sm:%s101] %v99

// kernel: rrcnn_block_apply.1
$region0: #{rrcnn_block_apply.1}
  #allocation0 [shape = 'u32[]', space=smem, size = 0x4, offset = 0x4, fixed_abs, tag = 'smem constant byte address 0x4 - core index']
  #allocation1 [shape = 'u32[144,128]{1,0:T(1,128)}', space=vmem, size = 0x12000, scoped, tag = 'internal scratch']
  %s0 = inlined_call_operand.vmem [shape: f32[32,128], index: 0, kind: input, shape index: {}]
  %s1 = inlined_call_operand.vmem [shape: f32[128,128], index: 1, kind: input, shape index: {}]
  %s2 = inlined_call_operand.vmem [shape: f32[1,128], index: 2, kind: input, shape index: {}]
  %s3 = inlined_call_operand.vmem [shape: f32[128,384], index: 3, kind: input, shape index: {}]
  %s4 = inlined_call_operand.vmem [shape: f32[1,128], index: 4, kind: input, shape index: {}]
  %s5 = inlined_call_operand.vmem [shape: f32[128,384], index: 5, kind: input, shape index: {}]
  %s6 = inlined_call_operand.vmem [shape: f32[1,128], index: 6, kind: input, shape index: {}]
  %s7 = inlined_call_operand.vmem [shape: f32[32,128], index: 7, kind: output, shape index: {}]
  %s8 = sld [smem:[#allocation0]]
  $region61: #{rrcnn_block_apply.1} parent=0
    _
  %s10 = ssub.s32 1, %s8
  %s11 = scalar_select 0, %s10, %s8
  loop: start=0, step=1, limit=4
  $region2: #{rrcnn_block_apply.1} parent=0 // loop_pre_header
    _
  $region3: #{rrcnn_block_apply.1} parent=0 // loop_header
    %s13 = sphi 0, %s17
    %p14 = scmp.ge.s32.totalorder %s13, 4
    %s23 = sphi 0, %s25
    %s26 = sphi 0, %s23
    %s27 = sphi 0, %s26
    %s43 = sphi 0, %s27
    %s47 = sphi 0, %s47
    %s49 = sphi 0, %s47
    %s50 = sphi 0, %s49
    %s64 = sphi 0, %s50
    %s68 = sphi 0, %s68
    %s70 = sphi 0, %s68
    %s71 = sphi 0, %s70
    %s85 = sphi 0, %s71
    %s89 = sphi 0, %s89
    %s91 = sphi 0, %s89
    %s92 = sphi 0, %s91
    %s106 = sphi 0, %s92
    %s110 = sphi 0, %s110
    %s112 = sphi 0, %s110
    %s113 = sphi 0, %s112
    %s127 = sphi 0, %s113
    %s131 = sphi 0, %s131
    %s133 = sphi 0, %s131
    %s134 = sphi 0, %s133
    %s148 = sphi 0, %s134
    %s152 = sphi 0, %s152
    %s154 = sphi 0, %s152
    %s155 = sphi 0, %s154
    %s169 = sphi 0, %s155
    %s175 = sphi 0, %s177
    %s178 = sphi 0, %s175
    %s179 = sphi 0, %s178
    %s195 = sphi 0, %s179
  $region4: #{rrcnn_block_apply.1} parent=0 // loop_header_branch
    %16 = sbr.rel (%p14) target = $region8
  $region5: #{rrcnn_block_apply.1} parent=0 // loop_body
    %s18 = ssub.s32 %s13, 1
    %s19 = ssub.s32 %s13, 2
    %s20 = sadd.s32 %s13, 1
    %s21 = ssub.s32 %s13, %s20
    %p22 = scmp.eq.s32.totalorder %s21, 0
    %s24 = sadd.s32 %s23, 1
    %s25 = scalar_select %p22, %s23, %s24
    %p28 = pneg %p22
    %p29 = scmp.eq.s32.totalorder %s13, 1
    %p30 = por %p28, %p29
    %p31 = scmp.ne.s32.totalorder %s23, %s26
    %p32 = scmp.eq.s32.totalorder %s13, 0
    %p33 = por %p31, %p32
    %p34 = scmp.ne.s32.totalorder %s23, %s26
    %p35 = scmp.eq.s32.totalorder %s18, 1
    %p36 = por %p34, %p35
    %p37 = scmp.ne.s32.totalorder %s26, %s27
    %p38 = scmp.eq.s32.totalorder %s18, 0
    %p39 = por %p37, %p38
    %p40 = scmp.ne.s32.totalorder %s26, %s27
    %p41 = scmp.eq.s32.totalorder %s19, 1
    %p42 = por %p40, %p41
    %p44 = scmp.ne.s32.totalorder %s27, %s43
    %p45 = scmp.eq.s32.totalorder %s19, 0
    %p46 = por %p44, %p45
    %s48 = sadd.s32 %s47, 1
    %p51 = scmp.eq.s32.totalorder %s13, 1
    %p52 = scmp.ne.s32.totalorder %s47, %s49
    %p53 = scmp.eq.s32.totalorder %s13, 0
    %p54 = por %p52, %p53
    %p55 = scmp.ne.s32.totalorder %s47, %s49
    %p56 = scmp.eq.s32.totalorder %s18, 1
    %p57 = por %p55, %p56
    %p58 = scmp.ne.s32.totalorder %s49, %s50
    %p59 = scmp.eq.s32.totalorder %s18, 0
    %p60 = por %p58, %p59
    %p61 = scmp.ne.s32.totalorder %s49, %s50
    %p62 = scmp.eq.s32.totalorder %s19, 1
    %p63 = por %p61, %p62
    %p65 = scmp.ne.s32.totalorder %s50, %s64
    %p66 = scmp.eq.s32.totalorder %s19, 0
    %p67 = por %p65, %p66
    %s69 = sadd.s32 %s68, 1
    %p72 = scmp.eq.s32.totalorder %s13, 1
    %p73 = scmp.ne.s32.totalorder %s68, %s70
    %p74 = scmp.eq.s32.totalorder %s13, 0
    %p75 = por %p73, %p74
    %p76 = scmp.ne.s32.totalorder %s68, %s70
    %p77 = scmp.eq.s32.totalorder %s18, 1
    %p78 = por %p76, %p77
    %p79 = scmp.ne.s32.totalorder %s70, %s71
    %p80 = scmp.eq.s32.totalorder %s18, 0
    %p81 = por %p79, %p80
    %p82 = scmp.ne.s32.totalorder %s70, %s71
    %p83 = scmp.eq.s32.totalorder %s19, 1
    %p84 = por %p82, %p83
    %p86 = scmp.ne.s32.totalorder %s71, %s85
    %p87 = scmp.eq.s32.totalorder %s19, 0
    %p88 = por %p86, %p87
    %s90 = sadd.s32 %s89, 1
    %p93 = scmp.eq.s32.totalorder %s13, 1
    %p94 = scmp.ne.s32.totalorder %s89, %s91
    %p95 = scmp.eq.s32.totalorder %s13, 0
    %p96 = por %p94, %p95
    %p97 = scmp.ne.s32.totalorder %s89, %s91
    %p98 = scmp.eq.s32.totalorder %s18, 1
    %p99 = por %p97, %p98
    %p100 = scmp.ne.s32.totalorder %s91, %s92
    %p101 = scmp.eq.s32.totalorder %s18, 0
    %p102 = por %p100, %p101
    %p103 = scmp.ne.s32.totalorder %s91, %s92
    %p104 = scmp.eq.s32.totalorder %s19, 1
    %p105 = por %p103, %p104
    %p107 = scmp.ne.s32.totalorder %s92, %s106
    %p108 = scmp.eq.s32.totalorder %s19, 0
    %p109 = por %p107, %p108
    %s111 = sadd.s32 %s110, 1
    %p114 = scmp.eq.s32.totalorder %s13, 1
    %p115 = scmp.ne.s32.totalorder %s110, %s112
    %p116 = scmp.eq.s32.totalorder %s13, 0
    %p117 = por %p115, %p116
    %p118 = scmp.ne.s32.totalorder %s110, %s112
    %p119 = scmp.eq.s32.totalorder %s18, 1
    %p120 = por %p118, %p119
    %p121 = scmp.ne.s32.totalorder %s112, %s113
    %p122 = scmp.eq.s32.totalorder %s18, 0
    %p123 = por %p121, %p122
    %p124 = scmp.ne.s32.totalorder %s112, %s113
    %p125 = scmp.eq.s32.totalorder %s19, 1
    %p126 = por %p124, %p125
    %p128 = scmp.ne.s32.totalorder %s113, %s127
    %p129 = scmp.eq.s32.totalorder %s19, 0
    %p130 = por %p128, %p129
    %s132 = sadd.s32 %s131, 1
    %p135 = scmp.eq.s32.totalorder %s13, 1
    %p136 = scmp.ne.s32.totalorder %s131, %s133
    %p137 = scmp.eq.s32.totalorder %s13, 0
    %p138 = por %p136, %p137
    %p139 = scmp.ne.s32.totalorder %s131, %s133
    %p140 = scmp.eq.s32.totalorder %s18, 1
    %p141 = por %p139, %p140
    %p142 = scmp.ne.s32.totalorder %s133, %s134
    %p143 = scmp.eq.s32.totalorder %s18, 0
    %p144 = por %p142, %p143
    %p145 = scmp.ne.s32.totalorder %s133, %s134
    %p146 = scmp.eq.s32.totalorder %s19, 1
    %p147 = por %p145, %p146
    %p149 = scmp.ne.s32.totalorder %s134, %s148
    %p150 = scmp.eq.s32.totalorder %s19, 0
    %p151 = por %p149, %p150
    %s153 = sadd.s32 %s152, 1
    %p156 = scmp.eq.s32.totalorder %s13, 1
    %p157 = scmp.ne.s32.totalorder %s152, %s154
    %p158 = scmp.eq.s32.totalorder %s13, 0
    %p159 = por %p157, %p158
    %p160 = scmp.ne.s32.totalorder %s152, %s154
    %p161 = scmp.eq.s32.totalorder %s18, 1
    %p162 = por %p160, %p161
    %p163 = scmp.ne.s32.totalorder %s154, %s155
    %p164 = scmp.eq.s32.totalorder %s18, 0
    %p165 = por %p163, %p164
    %p166 = scmp.ne.s32.totalorder %s154, %s155
    %p167 = scmp.eq.s32.totalorder %s19, 1
    %p168 = por %p166, %p167
    %p170 = scmp.ne.s32.totalorder %s155, %s169
    %p171 = scmp.eq.s32.totalorder %s19, 0
    %p172 = por %p170, %p171
    %s173 = ssub.s32 %s13, %s20
    %p174 = scmp.eq.s32.totalorder %s173, 0
    %s176 = sadd.s32 %s175, 1
    %s177 = scalar_select %p174, %s175, %s176
    %p180 = pneg %p174
    %p181 = scmp.eq.s32.totalorder %s13, 1
    %p182 = por %p180, %p181
    %p183 = scmp.ne.s32.totalorder %s175, %s178
    %p184 = scmp.eq.s32.totalorder %s13, 0
    %p185 = por %p183, %p184
    %p186 = scmp.ne.s32.totalorder %s175, %s178
    %p187 = scmp.eq.s32.totalorder %s18, 1
    %p188 = por %p186, %p187
    %p189 = scmp.ne.s32.totalorder %s178, %s179
    %p190 = scmp.eq.s32.totalorder %s18, 0
    %p191 = por %p189, %p190
    %p192 = scmp.ne.s32.totalorder %s178, %s179
    %p193 = scmp.eq.s32.totalorder %s19, 1
    %p194 = por %p192, %p193
    %p196 = scmp.ne.s32.totalorder %s179, %s195
    %p197 = scmp.eq.s32.totalorder %s19, 0
    %p198 = por %p196, %p197
    %p199 = scmp.le.s32.totalorder 1, %s13
    %p200 = scmp.lt.s32.totalorder %s13, 3
    %p201 = pnand %p199, %p200
    %p202 = pneg %p201
    // Predicated region
    $region9: #{rrcnn_block_apply.1} parent=5 // pred_check
      _
    $region10: #{rrcnn_block_apply.1} parent=5 // pred_check_branch
      %204 = sbr.rel (%p201) target = $region12
    $region11: #{rrcnn_block_apply.1} parent=5 // pred_region
      %s205 = ssub.s32 %s13, 1
      // Predicated region
      $region13: #{rrcnn_block_apply.1} parent=11 // pred_check
        %p206 = pneg %p60
      $region14: #{rrcnn_block_apply.1} parent=11 // pred_check_branch
        %208 = sbr.rel (%p206) target = $region16
      $region15: #{rrcnn_block_apply.1} parent=11 // pred_region
        _
      $region16: #{rrcnn_block_apply.1} parent=11 // pred_fallthru
        _
      // Predicated region
      $region17: #{rrcnn_block_apply.1} parent=11 // pred_check
        %p209 = pneg %p81
      $region18: #{rrcnn_block_apply.1} parent=11 // pred_check_branch
        %211 = sbr.rel (%p209) target = $region20
      $region19: #{rrcnn_block_apply.1} parent=11 // pred_region
        _
      $region20: #{rrcnn_block_apply.1} parent=11 // pred_fallthru
        _
      // Predicated region
      $region21: #{rrcnn_block_apply.1} parent=11 // pred_check
        %p212 = pneg %p102
      $region22: #{rrcnn_block_apply.1} parent=11 // pred_check_branch
        %214 = sbr.rel (%p212) target = $region24
      $region23: #{rrcnn_block_apply.1} parent=11 // pred_region
        _
      $region24: #{rrcnn_block_apply.1} parent=11 // pred_fallthru
        _
      // Predicated region
      $region25: #{rrcnn_block_apply.1} parent=11 // pred_check
        %p215 = pneg %p123
      $region26: #{rrcnn_block_apply.1} parent=11 // pred_check_branch
        %217 = sbr.rel (%p215) target = $region28
      $region27: #{rrcnn_block_apply.1} parent=11 // pred_region
        _
      $region28: #{rrcnn_block_apply.1} parent=11 // pred_fallthru
        _
      // Predicated region
      $region29: #{rrcnn_block_apply.1} parent=11 // pred_check
        %p218 = pneg %p144
      $region30: #{rrcnn_block_apply.1} parent=11 // pred_check_branch
        %220 = sbr.rel (%p218) target = $region32
      $region31: #{rrcnn_block_apply.1} parent=11 // pred_region
        _
      $region32: #{rrcnn_block_apply.1} parent=11 // pred_fallthru
        _
      // Predicated region
      $region33: #{rrcnn_block_apply.1} parent=11 // pred_check
        %p221 = pneg %p165
      $region34: #{rrcnn_block_apply.1} parent=11 // pred_check_branch
        %223 = sbr.rel (%p221) target = $region36
      $region35: #{rrcnn_block_apply.1} parent=11 // pred_region
        _
      $region36: #{rrcnn_block_apply.1} parent=11 // pred_fallthru
        _
    $region12: #{rrcnn_block_apply.1} parent=5 // pred_fallthru
      _
    %p224 = scmp.lt.s32.totalorder %s13, 2
    // Predicated region
    $region37: #{rrcnn_block_apply.1} parent=5 // pred_check
      %p225 = pneg %p224
    $region38: #{rrcnn_block_apply.1} parent=5 // pred_check_branch
      %227 = sbr.rel (%p225) target = $region40
    $region39: #{rrcnn_block_apply.1} parent=5 // pred_region
      // Predicated region
      $region41: #{rrcnn_block_apply.1} parent=39 // pred_check
        %p228 = pneg %p33
      $region42: #{rrcnn_block_apply.1} parent=39 // pred_check_branch
        %230 = sbr.rel (%p228) target = $region44
      $region43: #{rrcnn_block_apply.1} parent=39 // pred_region
        %s231 = smul.u32 2, %s13
        %p232 = scmp.lt.s32.totalorder %s231, 3
        %s233 = scalar_select %p232, %s231, 3
        %s234 = smul.addr %s233, 8
        %s235 = scalar_lea.vmem %s0, %s234
        %s236 = smul.u32 2, %s13
      $region44: #{rrcnn_block_apply.1} parent=39 // pred_fallthru
        _
    $region40: #{rrcnn_block_apply.1} parent=5 // pred_fallthru
      _
    %p237 = scmp.le.s32.totalorder 1, %s13
    %p238 = scmp.lt.s32.totalorder %s13, 3
    %p239 = pnand %p237, %p238
    %p240 = pneg %p239
    // Predicated region
    $region45: #{rrcnn_block_apply.1} parent=5 // pred_check
      _
    $region46: #{rrcnn_block_apply.1} parent=5 // pred_check_branch
      %242 = sbr.rel (%p239) target = $region48
    $region47: #{rrcnn_block_apply.1} parent=5 // pred_region
      %s243 = ssub.s32 %s13, 1
      %s244 = smul.u32 2, %s18
      %p245 = scmp.lt.s32.totalorder %s244, 3
      %s246 = scalar_select %p245, %s244, 3
      %s247 = smul.addr %s246, 8
      %s248 = scalar_lea.vmem %s0, %s247
      %p249 = pneg %p39
      %p250 = pneg %p36
      %p251 = pneg %p60
      %p252 = pneg %p57
      %p253 = pneg %p81
      %p254 = pneg %p78
      %p255 = pneg %p102
      %p256 = pneg %p99
      %p257 = pneg %p123
      %p258 = pneg %p120
      %p259 = pneg %p144
      %p260 = pneg %p141
      %p261 = pneg %p165
      %p262 = pneg %p162
      %p263 = pneg %p191
      %p264 = pneg %p188
      %s265 = smul.u32 2, %s18
      %p266 = scmp.lt.s32.totalorder %s265, 3
      %s267 = scalar_select %p266, %s265, 3
      %s268 = smul.addr %s267, 8
      %s269 = scalar_lea.vmem %s7, %s268
      %s270 = smul.u32 2, %s18
      %p271 = scmp.lt.s32.totalorder %s270, 3
      %s272 = scalar_select %p271, %s270, 3
      %s273 = smul.addr %s272, 8
      %s274 = scalar_lea.vmem %s0, %s273
      %s275 = smul.u32 2, %s18
      %s276 = smul.u32 2, %s18
      %p277 = scmp.lt.s32.totalorder %s276, 3
      %s278 = scalar_select %p277, %s276, 3
      %s279 = smul.addr %s278, 8
      %s280 = scalar_lea.vmem %s7, %s279
      %s281 = smul.u32 2, %s18
      %v282 = vlaneseq
      %v283 = vshrl.u32 %v282, 7
      %v284 = vadd.s32 %v283, 8
      %vm285 = vcmp.lt.s32.totalorder %v283, 0
      %v286 = vsub.s32 0, %v283
      %v287 = vsel %vm285, %v286, %v283
      %v288 = vshrl.u32 %v287, 4
      %v289 = vand.u32 %v287, 15
      %v290 = vsub.s32 0, %v289
      %v291 = vsel %vm285, %v290, %v289
      %vm292 = vcmp.lt.s32.totalorder %v284, 0
      %v293 = vsub.s32 0, %v284
      %v294 = vsel %vm292, %v293, %v284
      %v295 = vshrl.u32 %v294, 4
      %v296 = vand.u32 %v294, 15
      %v297 = vsub.s32 0, %v296
      %v298 = vsel %vm292, %v297, %v296
      %vm299 = vcmp.ne.s32.totalorder %v291, 0
      %vm300 = vcmp.ne.s32.totalorder %v298, 0
      %vm301 = vcmp.lt.s32.totalorder %v291, 0
      %vm302 = vcmp.lt.s32.totalorder %v298, 0
      %vm303 = vmand %vm301, %vm299
      %vm304 = vmand %vm302, %vm300
      %v305 = vadd.s32 %v291, 16
      %v306 = vadd.s32 %v298, 16
      %v307 = vsel %vm303, %v305, %v291
      %v308 = vsel %vm304, %v306, %v298
      %vm309 = vcmp.ne.s32.totalorder %v307, 0
      %vm310 = vcmp.ne.s32.totalorder %v308, 0
      %vm311 = vcmp.ne.s32.totalorder %v307, 15
      %vm312 = vcmp.ne.s32.totalorder %v308, 15
      %v313 = vld [vmem:[%s274] sm:$0xff]
      %v314 = vld [vmem:[%s274 + $0x8] sm:$0xff]
      %v315 = vld [vmem:[%s1] sm:$0xff]
      %v316 = vld [vmem:[%s1 + $0x8] sm:$0xff]
      %v317 = vld [vmem:[%s1 + $0x10] sm:$0xff]
      %v318 = vld [vmem:[%s1 + $0x18] sm:$0xff]
      %v319 = vld [vmem:[%s1 + $0x20] sm:$0xff]
      %v320 = vld [vmem:[%s1 + $0x28] sm:$0xff]
      %v321 = vld [vmem:[%s1 + $0x30] sm:$0xff]
      %v322 = vld [vmem:[%s1 + $0x38] sm:$0xff]
      %v323 = vld [vmem:[%s1 + $0x40] sm:$0xff]
      %v324 = vld [vmem:[%s1 + $0x48] sm:$0xff]
      %v325 = vld [vmem:[%s1 + $0x50] sm:$0xff]
      %v326 = vld [vmem:[%s1 + $0x58] sm:$0xff]
      %v327 = vld [vmem:[%s1 + $0x60] sm:$0xff]
      %v328 = vld [vmem:[%s1 + $0x68] sm:$0xff]
      %v329 = vld [vmem:[%s1 + $0x70] sm:$0xff]
      %v330 = vld [vmem:[%s1 + $0x78] sm:$0xff]
      %v331 = vld [vmem:[%s2] sm:$0x1]
      %v333 = vlaneseq
      %v334 = vshrl.u32 %v333, 7
      %v335 = vsub.s32 0, %v334
      %v336 = vrot.slane %v331, %v335
      %338 = vmatprep.subr.mxu0 0.0
      %339 = vmatpush1.msra.mxu0 %v330
      %340 = vmatprep.subr.mxu0 0.0
      %341 = vmatpush1.msra.mxu0 %v329
      %342 = vmatprep.subr.mxu0 0.0
      %343 = vmatpush1.msra.mxu0 %v328
      %344 = vmatprep.subr.mxu0 0.0
      %345 = vmatpush1.msra.mxu0 %v327
      %346 = vmatprep.subr.mxu0 0.0
      %347 = vmatpush1.msra.mxu0 %v326
      %348 = vmatprep.subr.mxu0 0.0
      %349 = vmatpush1.msra.mxu0 %v325
      %350 = vmatprep.subr.mxu0 0.0
      %351 = vmatpush1.msra.mxu0 %v324
      %352 = vmatprep.subr.mxu0 0.0
      %353 = vmatpush1.msra.mxu0 %v323
      %354 = vmatprep.subr.mxu0 0.0
      %355 = vmatpush1.msra.mxu0 %v322
      %356 = vmatprep.subr.mxu0 0.0
      %357 = vmatpush1.msra.mxu0 %v321
      %358 = vmatprep.subr.mxu0 0.0
      %359 = vmatpush1.msra.mxu0 %v320
      %360 = vmatprep.subr.mxu0 0.0
      %361 = vmatpush1.msra.mxu0 %v319
      %362 = vmatprep.subr.mxu0 0.0
      %363 = vmatpush1.msra.mxu0 %v318
      %364 = vmatprep.subr.mxu0 0.0
      %365 = vmatpush1.msra.mxu0 %v317
      %366 = vmatprep.subr.mxu0 0.0
      %367 = vmatpush1.msra.mxu0 %v316
      %368 = vmatprep.subr.mxu0 0.0
      %369 = vmatpush1.msra.mxu0 %v315
      %370 = vmatprep.subr.mxu0 0.0
      %371 = vmatpush2.msra.mxu0 0.0
      %372 = vmatprep.subr.mxu0 0.0
      %373 = vmatpush2.msra.mxu0 0.0
      %374 = vmatprep.subr.mxu0 0.0
      %375 = vmatpush2.msra.mxu0 0.0
      %376 = vmatprep.subr.mxu0 0.0
      %377 = vmatpush2.msra.mxu0 0.0
      %378 = vmatprep.subr.mxu0 0.0
      %379 = vmatpush2.msra.mxu0 0.0
      %380 = vmatprep.subr.mxu0 0.0
      %381 = vmatpush2.msra.mxu0 0.0
      %382 = vmatprep.subr.mxu0 0.0
      %383 = vmatpush2.msra.mxu0 0.0
      %384 = vmatprep.subr.mxu0 0.0
      %385 = vmatpush2.msra.mxu0 0.0
      %386 = vmatprep.subr.mxu0 0.0
      %387 = vmatpush2.msra.mxu0 0.0
      %388 = vmatprep.subr.mxu0 0.0
      %389 = vmatpush2.msra.mxu0 0.0
      %390 = vmatprep.subr.mxu0 0.0
      %391 = vmatpush2.msra.mxu0 0.0
      %392 = vmatprep.subr.mxu0 0.0
      %393 = vmatpush2.msra.mxu0 0.0
      %394 = vmatprep.subr.mxu0 0.0
      %395 = vmatpush2.msra.mxu0 0.0
      %396 = vmatprep.subr.mxu0 0.0
      %397 = vmatpush2.msra.mxu0 0.0
      %398 = vmatprep.subr.mxu0 0.0
      %399 = vmatpush2.msra.mxu0 0.0
      %400 = vmatprep.subr.mxu0 0.0
      %401 = vmatpush2.msra.mxu0 0.0
      %402 = vmatprep.mubr.f32.mxu0 0.0
      %403 = vmatmul.mubr.f32.gmra.mxu0 %v313
      %v404 = vpop.f32.mrf.mxu0
      %v405 = vadd.f32 %v336, %v404
      %v406 = vpop.f32.mrf.mxu0
      %407 = vmatprep.mubr.f32.mxu0 0.0
      %408 = vmatmul.mubr.f32.gmra.mxu0 %v314
      %v409 = vpop.f32.mrf.mxu0
      %v410 = vadd.f32 %v336, %v409
      %v411 = vpop.f32.mrf.mxu0
      %412 = vdwg.mxu0
      %v413 = vld [vmem:[%s4] sm:$0x1]
      %v415 = vlaneseq
      %v416 = vshrl.u32 %v415, 7
      %v417 = vsub.s32 0, %v416
      %v418 = vrot.slane %v413, %v417
      %v420 = vld [vmem:[%s3] sm:$0xff]
      %v421 = vld [vmem:[%s3 + $0x8] sm:$0xff]
      %v422 = vld [vmem:[%s3 + $0x10] sm:$0xff]
      %v423 = vld [vmem:[%s3 + $0x18] sm:$0xff]
      %v424 = vld [vmem:[%s3 + $0x20] sm:$0xff]
      %v425 = vld [vmem:[%s3 + $0x28] sm:$0xff]
      %v426 = vld [vmem:[%s3 + $0x30] sm:$0xff]
      %v427 = vld [vmem:[%s3 + $0x38] sm:$0xff]
      %v428 = vld [vmem:[%s3 + $0x40] sm:$0xff]
      %v429 = vld [vmem:[%s3 + $0x48] sm:$0xff]
      %v430 = vld [vmem:[%s3 + $0x50] sm:$0xff]
      %v431 = vld [vmem:[%s3 + $0x58] sm:$0xff]
      %v432 = vld [vmem:[%s3 + $0x60] sm:$0xff]
      %v433 = vld [vmem:[%s3 + $0x68] sm:$0xff]
      %v434 = vld [vmem:[%s3 + $0x70] sm:$0xff]
      %v435 = vld [vmem:[%s3 + $0x78] sm:$0xff]
      %v436 = vld [vmem:[%s3 + $0x80] sm:$0xff]
      %v437 = vld [vmem:[%s3 + $0x88] sm:$0xff]
      %v438 = vld [vmem:[%s3 + $0x90] sm:$0xff]
      %v439 = vld [vmem:[%s3 + $0x98] sm:$0xff]
      %v440 = vld [vmem:[%s3 + $0xa0] sm:$0xff]
      %v441 = vld [vmem:[%s3 + $0xa8] sm:$0xff]
      %v442 = vld [vmem:[%s3 + $0xb0] sm:$0xff]
      %v443 = vld [vmem:[%s3 + $0xb8] sm:$0xff]
      %v444 = vld [vmem:[%s3 + $0xc0] sm:$0xff]
      %v445 = vld [vmem:[%s3 + $0xc8] sm:$0xff]
      %v446 = vld [vmem:[%s3 + $0xd0] sm:$0xff]
      %v447 = vld [vmem:[%s3 + $0xd8] sm:$0xff]
      %v448 = vld [vmem:[%s3 + $0xe0] sm:$0xff]
      %v449 = vld [vmem:[%s3 + $0xe8] sm:$0xff]
      %v450 = vld [vmem:[%s3 + $0xf0] sm:$0xff]
      %v451 = vld [vmem:[%s3 + $0xf8] sm:$0xff]
      %v452 = vld [vmem:[%s3 + $0x100] sm:$0xff]
      %v453 = vld [vmem:[%s3 + $0x108] sm:$0xff]
      %v454 = vld [vmem:[%s3 + $0x110] sm:$0xff]
      %v455 = vld [vmem:[%s3 + $0x118] sm:$0xff]
      %v456 = vld [vmem:[%s3 + $0x120] sm:$0xff]
      %v457 = vld [vmem:[%s3 + $0x128] sm:$0xff]
      %v458 = vld [vmem:[%s3 + $0x130] sm:$0xff]
      %v459 = vld [vmem:[%s3 + $0x138] sm:$0xff]
      %v460 = vld [vmem:[%s3 + $0x140] sm:$0xff]
      %v461 = vld [vmem:[%s3 + $0x148] sm:$0xff]
      %v462 = vld [vmem:[%s3 + $0x150] sm:$0xff]
      %v463 = vld [vmem:[%s3 + $0x158] sm:$0xff]
      %v464 = vld [vmem:[%s3 + $0x160] sm:$0xff]
      %v465 = vld [vmem:[%s3 + $0x168] sm:$0xff]
      %v466 = vld [vmem:[%s3 + $0x170] sm:$0xff]
      %v467 = vld [vmem:[%s3 + $0x178] sm:$0xff]
      %468 = vmatprep.subr.mxu0 %v466
      %469 = vmatpush1.msra.mxu0 %v465
      %470 = vmatprep.subr.mxu0 %v463
      %471 = vmatpush1.msra.mxu0 %v462
      %472 = vmatprep.subr.mxu0 %v460
      %473 = vmatpush1.msra.mxu0 %v459
      %474 = vmatprep.subr.mxu0 %v457
      %475 = vmatpush1.msra.mxu0 %v456
      %476 = vmatprep.subr.mxu0 %v454
      %477 = vmatpush1.msra.mxu0 %v453
      %478 = vmatprep.subr.mxu0 %v451
      %479 = vmatpush1.msra.mxu0 %v450
      %480 = vmatprep.subr.mxu0 %v448
      %481 = vmatpush1.msra.mxu0 %v447
      %482 = vmatprep.subr.mxu0 %v445
      %483 = vmatpush1.msra.mxu0 %v444
      %484 = vmatprep.subr.mxu0 %v442
      %485 = vmatpush1.msra.mxu0 %v441
      %486 = vmatprep.subr.mxu0 %v439
      %487 = vmatpush1.msra.mxu0 %v438
      %488 = vmatprep.subr.mxu0 %v436
      %489 = vmatpush1.msra.mxu0 %v435
      %490 = vmatprep.subr.mxu0 %v433
      %491 = vmatpush1.msra.mxu0 %v432
      %492 = vmatprep.subr.mxu0 %v430
      %493 = vmatpush1.msra.mxu0 %v429
      %494 = vmatprep.subr.mxu0 %v427
      %495 = vmatpush1.msra.mxu0 %v426
      %496 = vmatprep.subr.mxu0 %v424
      %497 = vmatpush1.msra.mxu0 %v423
      %498 = vmatprep.subr.mxu0 %v421
      %499 = vmatpush1.msra.mxu0 %v420
      %500 = vmatprep.subr.mxu0 0.0
      %501 = vmatpush2.msra.mxu0 0.0
      %502 = vmatprep.subr.mxu0 0.0
      %503 = vmatpush2.msra.mxu0 0.0
      %504 = vmatprep.subr.mxu0 0.0
      %505 = vmatpush2.msra.mxu0 0.0
      %506 = vmatprep.subr.mxu0 0.0
      %507 = vmatpush2.msra.mxu0 0.0
      %508 = vmatprep.subr.mxu0 0.0
      %509 = vmatpush2.msra.mxu0 0.0
      %510 = vmatprep.subr.mxu0 0.0
      %511 = vmatpush2.msra.mxu0 0.0
      %512 = vmatprep.subr.mxu0 0.0
      %513 = vmatpush2.msra.mxu0 0.0
      %514 = vmatprep.subr.mxu0 0.0
      %515 = vmatpush2.msra.mxu0 0.0
      %516 = vmatprep.subr.mxu0 0.0
      %517 = vmatpush2.msra.mxu0 0.0
      %518 = vmatprep.subr.mxu0 0.0
      %519 = vmatpush2.msra.mxu0 0.0
      %520 = vmatprep.subr.mxu0 0.0
      %521 = vmatpush2.msra.mxu0 0.0
      %522 = vmatprep.subr.mxu0 0.0
      %523 = vmatpush2.msra.mxu0 0.0
      %524 = vmatprep.subr.mxu0 0.0
      %525 = vmatpush2.msra.mxu0 0.0
      %526 = vmatprep.subr.mxu0 0.0
      %527 = vmatpush2.msra.mxu0 0.0
      %528 = vmatprep.subr.mxu0 0.0
      %529 = vmatpush2.msra.mxu0 0.0
      %530 = vmatprep.subr.mxu0 0.0
      %531 = vmatpush2.msra.mxu0 0.0
      %532 = vmatprep.mubr.f32.mxu0 0.0
      %533 = vmatmul.mubr.f32.gmra.mxu0 %v405
      %v534 = vpop.f32.mrf.mxu0
      %v535 = vadd.f32 0.0, %v534
      %v536 = vpop.f32.mrf.mxu0
      %v537 = vadd.f32 0.0, %v536
      %538 = vmatprep.mubr.f32.mxu0 0.0
      %539 = vmatmul.mubr.f32.gmra.mxu0 %v410
      %v540 = vpop.f32.mrf.mxu0
      %v541 = vadd.f32 0.0, %v540
      %v542 = vpop.f32.mrf.mxu0
      %v543 = vadd.f32 0.0, %v542
      %544 = vdwg.mxu0
      %545 = vmatprep.subr.mxu0 0.0
      %546 = vmatpush1.msra.mxu0 %v467
      %547 = vmatprep.subr.mxu0 0.0
      %548 = vmatpush1.msra.mxu0 %v464
      %549 = vmatprep.subr.mxu0 0.0
      %550 = vmatpush1.msra.mxu0 %v461
      %551 = vmatprep.subr.mxu0 0.0
      %552 = vmatpush1.msra.mxu0 %v458
      %553 = vmatprep.subr.mxu0 0.0
      %554 = vmatpush1.msra.mxu0 %v455
      %555 = vmatprep.subr.mxu0 0.0
      %556 = vmatpush1.msra.mxu0 %v452
      %557 = vmatprep.subr.mxu0 0.0
      %558 = vmatpush1.msra.mxu0 %v449
      %559 = vmatprep.subr.mxu0 0.0
      %560 = vmatpush1.msra.mxu0 %v446
      %561 = vmatprep.subr.mxu0 0.0
      %562 = vmatpush1.msra.mxu0 %v443
      %563 = vmatprep.subr.mxu0 0.0
      %564 = vmatpush1.msra.mxu0 %v440
      %565 = vmatprep.subr.mxu0 0.0
      %566 = vmatpush1.msra.mxu0 %v437
      %567 = vmatprep.subr.mxu0 0.0
      %568 = vmatpush1.msra.mxu0 %v434
      %569 = vmatprep.subr.mxu0 0.0
      %570 = vmatpush1.msra.mxu0 %v431
      %571 = vmatprep.subr.mxu0 0.0
      %572 = vmatpush1.msra.mxu0 %v428
      %573 = vmatprep.subr.mxu0 0.0
      %574 = vmatpush1.msra.mxu0 %v425
      %575 = vmatprep.subr.mxu0 0.0
      %576 = vmatpush1.msra.mxu0 %v422
      %577 = vmatprep.subr.mxu0 0.0
      %578 = vmatpush2.msra.mxu0 0.0
      %579 = vmatprep.subr.mxu0 0.0
      %580 = vmatpush2.msra.mxu0 0.0
      %581 = vmatprep.subr.mxu0 0.0
      %582 = vmatpush2.msra.mxu0 0.0
      %583 = vmatprep.subr.mxu0 0.0
      %584 = vmatpush2.msra.mxu0 0.0
      %585 = vmatprep.subr.mxu0 0.0
      %586 = vmatpush2.msra.mxu0 0.0
      %587 = vmatprep.subr.mxu0 0.0
      %588 = vmatpush2.msra.mxu0 0.0
      %589 = vmatprep.subr.mxu0 0.0
      %590 = vmatpush2.msra.mxu0 0.0
      %591 = vmatprep.subr.mxu0 0.0
      %592 = vmatpush2.msra.mxu0 0.0
      %593 = vmatprep.subr.mxu0 0.0
      %594 = vmatpush2.msra.mxu0 0.0
      %595 = vmatprep.subr.mxu0 0.0
      %596 = vmatpush2.msra.mxu0 0.0
      %597 = vmatprep.subr.mxu0 0.0
      %598 = vmatpush2.msra.mxu0 0.0
      %599 = vmatprep.subr.mxu0 0.0
      %600 = vmatpush2.msra.mxu0 0.0
      %601 = vmatprep.subr.mxu0 0.0
      %602 = vmatpush2.msra.mxu0 0.0
      %603 = vmatprep.subr.mxu0 0.0
      %604 = vmatpush2.msra.mxu0 0.0
      %605 = vmatprep.subr.mxu0 0.0
      %606 = vmatpush2.msra.mxu0 0.0
      %607 = vmatprep.subr.mxu0 0.0
      %608 = vmatpush2.msra.mxu0 0.0
      %609 = vmatprep.mubr.f32.mxu0 0.0
      %610 = vmatmul.mubr.f32.gmra.mxu0 %v405
      %v611 = vpop.f32.mrf.mxu0
      %v612 = vadd.f32 0.0, %v611
      %v613 = vpop.f32.mrf.mxu0
      %614 = vmatprep.mubr.f32.mxu0 0.0
      %615 = vmatmul.mubr.f32.gmra.mxu0 %v410
      %v616 = vpop.f32.mrf.mxu0
      %v617 = vadd.f32 0.0, %v616
      %v618 = vpop.f32.mrf.mxu0
      %619 = vdwg.mxu0
      %v620 = vrot.slane %v535, 7
      %v621 = vrot.slane %v541, 7
      %vm622 = vcmp.lt.s32.totalorder %v283, 1
      %v623 = vsel %vm622, %v620, %v621
      %v624 = vsel %vm622, %v621, %v620
      %v625 = vsel %vm309, 1, 0
      %v626 = vsel %vm310, 1, 0
      %vm627 = vcmp.eq.s32.totalorder %v625, 1
      %vm628 = vcmp.eq.s32.totalorder %v626, 1
      %v629 = vsel %vm627, %v624, 0.0
      %v630 = vsel %vm628, %v623, 0.0
      %v631 = vadd.f32 %v537, %v629
      %v632 = vadd.f32 %v543, %v630
      %v633 = vrot.slane %v612, 1
      %v634 = vrot.slane %v617, 1
      %vm635 = vcmp.lt.s32.totalorder %v283, 7
      %v636 = vsel %vm635, %v633, %v634
      %v637 = vsel %vm635, %v634, %v633
      %v638 = vsel %vm311, 1, 0
      %v639 = vsel %vm312, 1, 0
      %vm640 = vcmp.eq.s32.totalorder %v638, 1
      %vm641 = vcmp.eq.s32.totalorder %v639, 1
      %v642 = vsel %vm640, %v636, 0.0
      %v643 = vsel %vm641, %v637, 0.0
      %v644 = vadd.f32 %v631, %v642
      %v645 = vadd.f32 %v632, %v643
      %v646 = vadd.f32 %v644, %v418
      %v647 = vadd.f32 %v645, %v418
      %v648 = vmax.f32 %v646, 0.0
      %v649 = vmax.f32 %v647, 0.0
      %v650 = vadd.f32 %v405, %v648
      %v651 = vadd.f32 %v410, %v649
      %652 = vmatprep.subr.mxu0 %v466
      %653 = vmatpush1.msra.mxu0 %v465
      %654 = vmatprep.subr.mxu0 %v463
      %655 = vmatpush1.msra.mxu0 %v462
      %656 = vmatprep.subr.mxu0 %v460
      %657 = vmatpush1.msra.mxu0 %v459
      %658 = vmatprep.subr.mxu0 %v457
      %659 = vmatpush1.msra.mxu0 %v456
      %660 = vmatprep.subr.mxu0 %v454
      %661 = vmatpush1.msra.mxu0 %v453
      %662 = vmatprep.subr.mxu0 %v451
      %663 = vmatpush1.msra.mxu0 %v450
      %664 = vmatprep.subr.mxu0 %v448
      %665 = vmatpush1.msra.mxu0 %v447
      %666 = vmatprep.subr.mxu0 %v445
      %667 = vmatpush1.msra.mxu0 %v444
      %668 = vmatprep.subr.mxu0 %v442
      %669 = vmatpush1.msra.mxu0 %v441
      %670 = vmatprep.subr.mxu0 %v439
      %671 = vmatpush1.msra.mxu0 %v438
      %672 = vmatprep.subr.mxu0 %v436
      %673 = vmatpush1.msra.mxu0 %v435
      %674 = vmatprep.subr.mxu0 %v433
      %675 = vmatpush1.msra.mxu0 %v432
      %676 = vmatprep.subr.mxu0 %v430
      %677 = vmatpush1.msra.mxu0 %v429
      %678 = vmatprep.subr.mxu0 %v427
      %679 = vmatpush1.msra.mxu0 %v426
      %680 = vmatprep.subr.mxu0 %v424
      %681 = vmatpush1.msra.mxu0 %v423
      %682 = vmatprep.subr.mxu0 %v421
      %683 = vmatpush1.msra.mxu0 %v420
      %684 = vmatprep.subr.mxu0 0.0
      %685 = vmatpush2.msra.mxu0 0.0
      %686 = vmatprep.subr.mxu0 0.0
      %687 = vmatpush2.msra.mxu0 0.0
      %688 = vmatprep.subr.mxu0 0.0
      %689 = vmatpush2.msra.mxu0 0.0
      %690 = vmatprep.subr.mxu0 0.0
      %691 = vmatpush2.msra.mxu0 0.0
      %692 = vmatprep.subr.mxu0 0.0
      %693 = vmatpush2.msra.mxu0 0.0
      %694 = vmatprep.subr.mxu0 0.0
      %695 = vmatpush2.msra.mxu0 0.0
      %696 = vmatprep.subr.mxu0 0.0
      %697 = vmatpush2.msra.mxu0 0.0
      %698 = vmatprep.subr.mxu0 0.0
      %699 = vmatpush2.msra.mxu0 0.0
      %700 = vmatprep.subr.mxu0 0.0
      %701 = vmatpush2.msra.mxu0 0.0
      %702 = vmatprep.subr.mxu0 0.0
      %703 = vmatpush2.msra.mxu0 0.0
      %704 = vmatprep.subr.mxu0 0.0
      %705 = vmatpush2.msra.mxu0 0.0
      %706 = vmatprep.subr.mxu0 0.0
      %707 = vmatpush2.msra.mxu0 0.0
      %708 = vmatprep.subr.mxu0 0.0
      %709 = vmatpush2.msra.mxu0 0.0
      %710 = vmatprep.subr.mxu0 0.0
      %711 = vmatpush2.msra.mxu0 0.0
      %712 = vmatprep.subr.mxu0 0.0
      %713 = vmatpush2.msra.mxu0 0.0
      %714 = vmatprep.subr.mxu0 0.0
      %715 = vmatpush2.msra.mxu0 0.0
      %716 = vmatprep.mubr.f32.mxu0 0.0
      %717 = vmatmul.mubr.f32.gmra.mxu0 %v650
      %v718 = vpop.f32.mrf.mxu0
      %v719 = vadd.f32 0.0, %v718
      %v720 = vpop.f32.mrf.mxu0
      %v721 = vadd.f32 0.0, %v720
      %722 = vmatprep.mubr.f32.mxu0 0.0
      %723 = vmatmul.mubr.f32.gmra.mxu0 %v651
      %v724 = vpop.f32.mrf.mxu0
      %v725 = vadd.f32 0.0, %v724
      %v726 = vpop.f32.mrf.mxu0
      %v727 = vadd.f32 0.0, %v726
      %728 = vdwg.mxu0
      %729 = vmatprep.subr.mxu0 0.0
      %730 = vmatpush1.msra.mxu0 %v467
      %731 = vmatprep.subr.mxu0 0.0
      %732 = vmatpush1.msra.mxu0 %v464
      %733 = vmatprep.subr.mxu0 0.0
      %734 = vmatpush1.msra.mxu0 %v461
      %735 = vmatprep.subr.mxu0 0.0
      %736 = vmatpush1.msra.mxu0 %v458
      %737 = vmatprep.subr.mxu0 0.0
      %738 = vmatpush1.msra.mxu0 %v455
      %739 = vmatprep.subr.mxu0 0.0
      %740 = vmatpush1.msra.mxu0 %v452
      %741 = vmatprep.subr.mxu0 0.0
      %742 = vmatpush1.msra.mxu0 %v449
      %743 = vmatprep.subr.mxu0 0.0
      %744 = vmatpush1.msra.mxu0 %v446
      %745 = vmatprep.subr.mxu0 0.0
      %746 = vmatpush1.msra.mxu0 %v443
      %747 = vmatprep.subr.mxu0 0.0
      %748 = vmatpush1.msra.mxu0 %v440
      %749 = vmatprep.subr.mxu0 0.0
      %750 = vmatpush1.msra.mxu0 %v437
      %751 = vmatprep.subr.mxu0 0.0
      %752 = vmatpush1.msra.mxu0 %v434
      %753 = vmatprep.subr.mxu0 0.0
      %754 = vmatpush1.msra.mxu0 %v431
      %755 = vmatprep.subr.mxu0 0.0
      %756 = vmatpush1.msra.mxu0 %v428
      %757 = vmatprep.subr.mxu0 0.0
      %758 = vmatpush1.msra.mxu0 %v425
      %759 = vmatprep.subr.mxu0 0.0
      %760 = vmatpush1.msra.mxu0 %v422
      %761 = vmatprep.subr.mxu0 0.0
      %762 = vmatpush2.msra.mxu0 0.0
      %763 = vmatprep.subr.mxu0 0.0
      %764 = vmatpush2.msra.mxu0 0.0
      %765 = vmatprep.subr.mxu0 0.0
      %766 = vmatpush2.msra.mxu0 0.0
      %767 = vmatprep.subr.mxu0 0.0
      %768 = vmatpush2.msra.mxu0 0.0
      %769 = vmatprep.subr.mxu0 0.0
      %770 = vmatpush2.msra.mxu0 0.0
      %771 = vmatprep.subr.mxu0 0.0
      %772 = vmatpush2.msra.mxu0 0.0
      %773 = vmatprep.subr.mxu0 0.0
      %774 = vmatpush2.msra.mxu0 0.0
      %775 = vmatprep.subr.mxu0 0.0
      %776 = vmatpush2.msra.mxu0 0.0
      %777 = vmatprep.subr.mxu0 0.0
      %778 = vmatpush2.msra.mxu0 0.0
      %779 = vmatprep.subr.mxu0 0.0
      %780 = vmatpush2.msra.mxu0 0.0
      %781 = vmatprep.subr.mxu0 0.0
      %782 = vmatpush2.msra.mxu0 0.0
      %783 = vmatprep.subr.mxu0 0.0
      %784 = vmatpush2.msra.mxu0 0.0
      %785 = vmatprep.subr.mxu0 0.0
      %786 = vmatpush2.msra.mxu0 0.0
      %787 = vmatprep.subr.mxu0 0.0
      %788 = vmatpush2.msra.mxu0 0.0
      %789 = vmatprep.subr.mxu0 0.0
      %790 = vmatpush2.msra.mxu0 0.0
      %791 = vmatprep.subr.mxu0 0.0
      %792 = vmatpush2.msra.mxu0 0.0
      %793 = vmatprep.mubr.f32.mxu0 0.0
      %794 = vmatmul.mubr.f32.gmra.mxu0 %v650
      %v795 = vpop.f32.mrf.mxu0
      %v796 = vadd.f32 0.0, %v795
      %v797 = vpop.f32.mrf.mxu0
      %798 = vmatprep.mubr.f32.mxu0 0.0
      %799 = vmatmul.mubr.f32.gmra.mxu0 %v651
      %v800 = vpop.f32.mrf.mxu0
      %v801 = vadd.f32 0.0, %v800
      %v802 = vpop.f32.mrf.mxu0
      %803 = vdwg.mxu0
      %v804 = vrot.slane %v719, 7
      %v805 = vrot.slane %v725, 7
      %v806 = vsel %vm622, %v804, %v805
      %v807 = vsel %vm622, %v805, %v804
      %v808 = vsel %vm627, %v807, 0.0
      %v809 = vsel %vm628, %v806, 0.0
      %v810 = vadd.f32 %v721, %v808
      %v811 = vadd.f32 %v727, %v809
      %v812 = vrot.slane %v796, 1
      %v813 = vrot.slane %v801, 1
      %v814 = vsel %vm635, %v812, %v813
      %v815 = vsel %vm635, %v813, %v812
      %v816 = vsel %vm640, %v814, 0.0
      %v817 = vsel %vm641, %v815, 0.0
      %v818 = vadd.f32 %v810, %v816
      %v819 = vadd.f32 %v811, %v817
      %v820 = vadd.f32 %v818, %v418
      %v821 = vadd.f32 %v819, %v418
      %v822 = vmax.f32 %v820, 0.0
      %v823 = vmax.f32 %v821, 0.0
      %v824 = vadd.f32 %v405, %v822
      %v825 = vadd.f32 %v410, %v823
      %826 = vmatprep.subr.mxu0 %v466
      %827 = vmatpush1.msra.mxu0 %v465
      %828 = vmatprep.subr.mxu0 %v463
      %829 = vmatpush1.msra.mxu0 %v462
      %830 = vmatprep.subr.mxu0 %v460
      %831 = vmatpush1.msra.mxu0 %v459
      %832 = vmatprep.subr.mxu0 %v457
      %833 = vmatpush1.msra.mxu0 %v456
      %834 = vmatprep.subr.mxu0 %v454
      %835 = vmatpush1.msra.mxu0 %v453
      %836 = vmatprep.subr.mxu0 %v451
      %837 = vmatpush1.msra.mxu0 %v450
      %838 = vmatprep.subr.mxu0 %v448
      %839 = vmatpush1.msra.mxu0 %v447
      %840 = vmatprep.subr.mxu0 %v445
      %841 = vmatpush1.msra.mxu0 %v444
      %842 = vmatprep.subr.mxu0 %v442
      %843 = vmatpush1.msra.mxu0 %v441
      %844 = vmatprep.subr.mxu0 %v439
      %845 = vmatpush1.msra.mxu0 %v438
      %846 = vmatprep.subr.mxu0 %v436
      %847 = vmatpush1.msra.mxu0 %v435
      %848 = vmatprep.subr.mxu0 %v433
      %849 = vmatpush1.msra.mxu0 %v432
      %850 = vmatprep.subr.mxu0 %v430
      %851 = vmatpush1.msra.mxu0 %v429
      %852 = vmatprep.subr.mxu0 %v427
      %853 = vmatpush1.msra.mxu0 %v426
      %854 = vmatprep.subr.mxu0 %v424
      %855 = vmatpush1.msra.mxu0 %v423
      %856 = vmatprep.subr.mxu0 %v421
      %857 = vmatpush1.msra.mxu0 %v420
      %858 = vmatprep.subr.mxu0 0.0
      %859 = vmatpush2.msra.mxu0 0.0
      %860 = vmatprep.subr.mxu0 0.0
      %861 = vmatpush2.msra.mxu0 0.0
      %862 = vmatprep.subr.mxu0 0.0
      %863 = vmatpush2.msra.mxu0 0.0
      %864 = vmatprep.subr.mxu0 0.0
      %865 = vmatpush2.msra.mxu0 0.0
      %866 = vmatprep.subr.mxu0 0.0
      %867 = vmatpush2.msra.mxu0 0.0
      %868 = vmatprep.subr.mxu0 0.0
      %869 = vmatpush2.msra.mxu0 0.0
      %870 = vmatprep.subr.mxu0 0.0
      %871 = vmatpush2.msra.mxu0 0.0
      %872 = vmatprep.subr.mxu0 0.0
      %873 = vmatpush2.msra.mxu0 0.0
      %874 = vmatprep.subr.mxu0 0.0
      %875 = vmatpush2.msra.mxu0 0.0
      %876 = vmatprep.subr.mxu0 0.0
      %877 = vmatpush2.msra.mxu0 0.0
      %878 = vmatprep.subr.mxu0 0.0
      %879 = vmatpush2.msra.mxu0 0.0
      %880 = vmatprep.subr.mxu0 0.0
      %881 = vmatpush2.msra.mxu0 0.0
      %882 = vmatprep.subr.mxu0 0.0
      %883 = vmatpush2.msra.mxu0 0.0
      %884 = vmatprep.subr.mxu0 0.0
      %885 = vmatpush2.msra.mxu0 0.0
      %886 = vmatprep.subr.mxu0 0.0
      %887 = vmatpush2.msra.mxu0 0.0
      %888 = vmatprep.subr.mxu0 0.0
      %889 = vmatpush2.msra.mxu0 0.0
      %890 = vmatprep.mubr.f32.mxu0 0.0
      %891 = vmatmul.mubr.f32.gmra.mxu0 %v824
      %v892 = vpop.f32.mrf.mxu0
      %v893 = vadd.f32 0.0, %v892
      %v894 = vpop.f32.mrf.mxu0
      %v895 = vadd.f32 0.0, %v894
      %896 = vmatprep.mubr.f32.mxu0 0.0
      %897 = vmatmul.mubr.f32.gmra.mxu0 %v825
      %v898 = vpop.f32.mrf.mxu0
      %v899 = vadd.f32 0.0, %v898
      %v900 = vpop.f32.mrf.mxu0
      %v901 = vadd.f32 0.0, %v900
      %902 = vdwg.mxu0
      %903 = vmatprep.subr.mxu0 0.0
      %904 = vmatpush1.msra.mxu0 %v467
      %905 = vmatprep.subr.mxu0 0.0
      %906 = vmatpush1.msra.mxu0 %v464
      %907 = vmatprep.subr.mxu0 0.0
      %908 = vmatpush1.msra.mxu0 %v461
      %909 = vmatprep.subr.mxu0 0.0
      %910 = vmatpush1.msra.mxu0 %v458
      %911 = vmatprep.subr.mxu0 0.0
      %912 = vmatpush1.msra.mxu0 %v455
      %913 = vmatprep.subr.mxu0 0.0
      %914 = vmatpush1.msra.mxu0 %v452
      %915 = vmatprep.subr.mxu0 0.0
      %916 = vmatpush1.msra.mxu0 %v449
      %917 = vmatprep.subr.mxu0 0.0
      %918 = vmatpush1.msra.mxu0 %v446
      %919 = vmatprep.subr.mxu0 0.0
      %920 = vmatpush1.msra.mxu0 %v443
      %921 = vmatprep.subr.mxu0 0.0
      %922 = vmatpush1.msra.mxu0 %v440
      %923 = vmatprep.subr.mxu0 0.0
      %924 = vmatpush1.msra.mxu0 %v437
      %925 = vmatprep.subr.mxu0 0.0
      %926 = vmatpush1.msra.mxu0 %v434
      %927 = vmatprep.subr.mxu0 0.0
      %928 = vmatpush1.msra.mxu0 %v431
      %929 = vmatprep.subr.mxu0 0.0
      %930 = vmatpush1.msra.mxu0 %v428
      %931 = vmatprep.subr.mxu0 0.0
      %932 = vmatpush1.msra.mxu0 %v425
      %933 = vmatprep.subr.mxu0 0.0
      %934 = vmatpush1.msra.mxu0 %v422
      %935 = vmatprep.subr.mxu0 0.0
      %936 = vmatpush2.msra.mxu0 0.0
      %937 = vmatprep.subr.mxu0 0.0
      %938 = vmatpush2.msra.mxu0 0.0
      %939 = vmatprep.subr.mxu0 0.0
      %940 = vmatpush2.msra.mxu0 0.0
      %941 = vmatprep.subr.mxu0 0.0
      %942 = vmatpush2.msra.mxu0 0.0
      %943 = vmatprep.subr.mxu0 0.0
      %944 = vmatpush2.msra.mxu0 0.0
      %945 = vmatprep.subr.mxu0 0.0
      %946 = vmatpush2.msra.mxu0 0.0
      %947 = vmatprep.subr.mxu0 0.0
      %948 = vmatpush2.msra.mxu0 0.0
      %949 = vmatprep.subr.mxu0 0.0
      %950 = vmatpush2.msra.mxu0 0.0
      %951 = vmatprep.subr.mxu0 0.0
      %952 = vmatpush2.msra.mxu0 0.0
      %953 = vmatprep.subr.mxu0 0.0
      %954 = vmatpush2.msra.mxu0 0.0
      %955 = vmatprep.subr.mxu0 0.0
      %956 = vmatpush2.msra.mxu0 0.0
      %957 = vmatprep.subr.mxu0 0.0
      %958 = vmatpush2.msra.mxu0 0.0
      %959 = vmatprep.subr.mxu0 0.0
      %960 = vmatpush2.msra.mxu0 0.0
      %961 = vmatprep.subr.mxu0 0.0
      %962 = vmatpush2.msra.mxu0 0.0
      %963 = vmatprep.subr.mxu0 0.0
      %964 = vmatpush2.msra.mxu0 0.0
      %965 = vmatprep.subr.mxu0 0.0
      %966 = vmatpush2.msra.mxu0 0.0
      %967 = vmatprep.mubr.f32.mxu0 0.0
      %968 = vmatmul.mubr.f32.gmra.mxu0 %v824
      %v969 = vpop.f32.mrf.mxu0
      %v970 = vadd.f32 0.0, %v969
      %v971 = vpop.f32.mrf.mxu0
      %972 = vmatprep.mubr.f32.mxu0 0.0
      %973 = vmatmul.mubr.f32.gmra.mxu0 %v825
      %v974 = vpop.f32.mrf.mxu0
      %v975 = vadd.f32 0.0, %v974
      %v976 = vpop.f32.mrf.mxu0
      %977 = vdwg.mxu0
      %v978 = vrot.slane %v893, 7
      %v979 = vrot.slane %v899, 7
      %v980 = vsel %vm622, %v978, %v979
      %v981 = vsel %vm622, %v979, %v978
      %v982 = vsel %vm627, %v981, 0.0
      %v983 = vsel %vm628, %v980, 0.0
      %v984 = vadd.f32 %v895, %v982
      %v985 = vadd.f32 %v901, %v983
      %v986 = vrot.slane %v970, 1
      %v987 = vrot.slane %v975, 1
      %v988 = vsel %vm635, %v986, %v987
      %v989 = vsel %vm635, %v987, %v986
      %v990 = vsel %vm640, %v988, 0.0
      %v991 = vsel %vm641, %v989, 0.0
      %v992 = vadd.f32 %v984, %v990
      %v993 = vadd.f32 %v985, %v991
      %v994 = vadd.f32 %v992, %v418
      %v995 = vadd.f32 %v993, %v418
      %v996 = vmax.f32 %v994, 0.0
      %v997 = vmax.f32 %v995, 0.0
      %v998 = vld [vmem:[%s6] sm:$0x1]
      %v1000 = vlaneseq
      %v1001 = vshrl.u32 %v1000, 7
      %v1002 = vsub.s32 0, %v1001
      %v1003 = vrot.slane %v998, %v1002
      %v1005 = vld [vmem:[%s5] sm:$0xff]
      %v1006 = vld [vmem:[%s5 + $0x8] sm:$0xff]
      %v1007 = vld [vmem:[%s5 + $0x10] sm:$0xff]
      %v1008 = vld [vmem:[%s5 + $0x18] sm:$0xff]
      %v1009 = vld [vmem:[%s5 + $0x20] sm:$0xff]
      %v1010 = vld [vmem:[%s5 + $0x28] sm:$0xff]
      %v1011 = vld [vmem:[%s5 + $0x30] sm:$0xff]
      %v1012 = vld [vmem:[%s5 + $0x38] sm:$0xff]
      %v1013 = vld [vmem:[%s5 + $0x40] sm:$0xff]
      %v1014 = vld [vmem:[%s5 + $0x48] sm:$0xff]
      %v1015 = vld [vmem:[%s5 + $0x50] sm:$0xff]
      %v1016 = vld [vmem:[%s5 + $0x58] sm:$0xff]
      %v1017 = vld [vmem:[%s5 + $0x60] sm:$0xff]
      %v1018 = vld [vmem:[%s5 + $0x68] sm:$0xff]
      %v1019 = vld [vmem:[%s5 + $0x70] sm:$0xff]
      %v1020 = vld [vmem:[%s5 + $0x78] sm:$0xff]
      %v1021 = vld [vmem:[%s5 + $0x80] sm:$0xff]
      %v1022 = vld [vmem:[%s5 + $0x88] sm:$0xff]
      %v1023 = vld [vmem:[%s5 + $0x90] sm:$0xff]
      %v1024 = vld [vmem:[%s5 + $0x98] sm:$0xff]
      %v1025 = vld [vmem:[%s5 + $0xa0] sm:$0xff]
      %v1026 = vld [vmem:[%s5 + $0xa8] sm:$0xff]
      %v1027 = vld [vmem:[%s5 + $0xb0] sm:$0xff]
      %v1028 = vld [vmem:[%s5 + $0xb8] sm:$0xff]
      %v1029 = vld [vmem:[%s5 + $0xc0] sm:$0xff]
      %v1030 = vld [vmem:[%s5 + $0xc8] sm:$0xff]
      %v1031 = vld [vmem:[%s5 + $0xd0] sm:$0xff]
      %v1032 = vld [vmem:[%s5 + $0xd8] sm:$0xff]
      %v1033 = vld [vmem:[%s5 + $0xe0] sm:$0xff]
      %v1034 = vld [vmem:[%s5 + $0xe8] sm:$0xff]
      %v1035 = vld [vmem:[%s5 + $0xf0] sm:$0xff]
      %v1036 = vld [vmem:[%s5 + $0xf8] sm:$0xff]
      %v1037 = vld [vmem:[%s5 + $0x100] sm:$0xff]
      %v1038 = vld [vmem:[%s5 + $0x108] sm:$0xff]
      %v1039 = vld [vmem:[%s5 + $0x110] sm:$0xff]
      %v1040 = vld [vmem:[%s5 + $0x118] sm:$0xff]
      %v1041 = vld [vmem:[%s5 + $0x120] sm:$0xff]
      %v1042 = vld [vmem:[%s5 + $0x128] sm:$0xff]
      %v1043 = vld [vmem:[%s5 + $0x130] sm:$0xff]
      %v1044 = vld [vmem:[%s5 + $0x138] sm:$0xff]
      %v1045 = vld [vmem:[%s5 + $0x140] sm:$0xff]
      %v1046 = vld [vmem:[%s5 + $0x148] sm:$0xff]
      %v1047 = vld [vmem:[%s5 + $0x150] sm:$0xff]
      %v1048 = vld [vmem:[%s5 + $0x158] sm:$0xff]
      %v1049 = vld [vmem:[%s5 + $0x160] sm:$0xff]
      %v1050 = vld [vmem:[%s5 + $0x168] sm:$0xff]
      %v1051 = vld [vmem:[%s5 + $0x170] sm:$0xff]
      %v1052 = vld [vmem:[%s5 + $0x178] sm:$0xff]
      %1053 = vmatprep.subr.mxu0 %v1051
      %1054 = vmatpush1.msra.mxu0 %v1050
      %1055 = vmatprep.subr.mxu0 %v1048
      %1056 = vmatpush1.msra.mxu0 %v1047
      %1057 = vmatprep.subr.mxu0 %v1045
      %1058 = vmatpush1.msra.mxu0 %v1044
      %1059 = vmatprep.subr.mxu0 %v1042
      %1060 = vmatpush1.msra.mxu0 %v1041
      %1061 = vmatprep.subr.mxu0 %v1039
      %1062 = vmatpush1.msra.mxu0 %v1038
      %1063 = vmatprep.subr.mxu0 %v1036
      %1064 = vmatpush1.msra.mxu0 %v1035
      %1065 = vmatprep.subr.mxu0 %v1033
      %1066 = vmatpush1.msra.mxu0 %v1032
      %1067 = vmatprep.subr.mxu0 %v1030
      %1068 = vmatpush1.msra.mxu0 %v1029
      %1069 = vmatprep.subr.mxu0 %v1027
      %1070 = vmatpush1.msra.mxu0 %v1026
      %1071 = vmatprep.subr.mxu0 %v1024
      %1072 = vmatpush1.msra.mxu0 %v1023
      %1073 = vmatprep.subr.mxu0 %v1021
      %1074 = vmatpush1.msra.mxu0 %v1020
      %1075 = vmatprep.subr.mxu0 %v1018
      %1076 = vmatpush1.msra.mxu0 %v1017
      %1077 = vmatprep.subr.mxu0 %v1015
      %1078 = vmatpush1.msra.mxu0 %v1014
      %1079 = vmatprep.subr.mxu0 %v1012
      %1080 = vmatpush1.msra.mxu0 %v1011
      %1081 = vmatprep.subr.mxu0 %v1009
      %1082 = vmatpush1.msra.mxu0 %v1008
      %1083 = vmatprep.subr.mxu0 %v1006
      %1084 = vmatpush1.msra.mxu0 %v1005
      %1085 = vmatprep.subr.mxu0 0.0
      %1086 = vmatpush2.msra.mxu0 0.0
      %1087 = vmatprep.subr.mxu0 0.0
      %1088 = vmatpush2.msra.mxu0 0.0
      %1089 = vmatprep.subr.mxu0 0.0
      %1090 = vmatpush2.msra.mxu0 0.0
      %1091 = vmatprep.subr.mxu0 0.0
      %1092 = vmatpush2.msra.mxu0 0.0
      %1093 = vmatprep.subr.mxu0 0.0
      %1094 = vmatpush2.msra.mxu0 0.0
      %1095 = vmatprep.subr.mxu0 0.0
      %1096 = vmatpush2.msra.mxu0 0.0
      %1097 = vmatprep.subr.mxu0 0.0
      %1098 = vmatpush2.msra.mxu0 0.0
      %1099 = vmatprep.subr.mxu0 0.0
      %1100 = vmatpush2.msra.mxu0 0.0
      %1101 = vmatprep.subr.mxu0 0.0
      %1102 = vmatpush2.msra.mxu0 0.0
      %1103 = vmatprep.subr.mxu0 0.0
      %1104 = vmatpush2.msra.mxu0 0.0
      %1105 = vmatprep.subr.mxu0 0.0
      %1106 = vmatpush2.msra.mxu0 0.0
      %1107 = vmatprep.subr.mxu0 0.0
      %1108 = vmatpush2.msra.mxu0 0.0
      %1109 = vmatprep.subr.mxu0 0.0
      %1110 = vmatpush2.msra.mxu0 0.0
      %1111 = vmatprep.subr.mxu0 0.0
      %1112 = vmatpush2.msra.mxu0 0.0
      %1113 = vmatprep.subr.mxu0 0.0
      %1114 = vmatpush2.msra.mxu0 0.0
      %1115 = vmatprep.subr.mxu0 0.0
      %1116 = vmatpush2.msra.mxu0 0.0
      %1117 = vmatprep.mubr.f32.mxu0 0.0
      %1118 = vmatmul.mubr.f32.gmra.mxu0 %v996
      %v1119 = vpop.f32.mrf.mxu0
      %v1120 = vadd.f32 0.0, %v1119
      %v1121 = vpop.f32.mrf.mxu0
      %v1122 = vadd.f32 0.0, %v1121
      %1123 = vmatprep.mubr.f32.mxu0 0.0
      %1124 = vmatmul.mubr.f32.gmra.mxu0 %v997
      %v1125 = vpop.f32.mrf.mxu0
      %v1126 = vadd.f32 0.0, %v1125
      %v1127 = vpop.f32.mrf.mxu0
      %v1128 = vadd.f32 0.0, %v1127
      %1129 = vdwg.mxu0
      %1130 = vmatprep.subr.mxu0 0.0
      %1131 = vmatpush1.msra.mxu0 %v1052
      %1132 = vmatprep.subr.mxu0 0.0
      %1133 = vmatpush1.msra.mxu0 %v1049
      %1134 = vmatprep.subr.mxu0 0.0
      %1135 = vmatpush1.msra.mxu0 %v1046
      %1136 = vmatprep.subr.mxu0 0.0
      %1137 = vmatpush1.msra.mxu0 %v1043
      %1138 = vmatprep.subr.mxu0 0.0
      %1139 = vmatpush1.msra.mxu0 %v1040
      %1140 = vmatprep.subr.mxu0 0.0
      %1141 = vmatpush1.msra.mxu0 %v1037
      %1142 = vmatprep.subr.mxu0 0.0
      %1143 = vmatpush1.msra.mxu0 %v1034
      %1144 = vmatprep.subr.mxu0 0.0
      %1145 = vmatpush1.msra.mxu0 %v1031
      %1146 = vmatprep.subr.mxu0 0.0
      %1147 = vmatpush1.msra.mxu0 %v1028
      %1148 = vmatprep.subr.mxu0 0.0
      %1149 = vmatpush1.msra.mxu0 %v1025
      %1150 = vmatprep.subr.mxu0 0.0
      %1151 = vmatpush1.msra.mxu0 %v1022
      %1152 = vmatprep.subr.mxu0 0.0
      %1153 = vmatpush1.msra.mxu0 %v1019
      %1154 = vmatprep.subr.mxu0 0.0
      %1155 = vmatpush1.msra.mxu0 %v1016
      %1156 = vmatprep.subr.mxu0 0.0
      %1157 = vmatpush1.msra.mxu0 %v1013
      %1158 = vmatprep.subr.mxu0 0.0
      %1159 = vmatpush1.msra.mxu0 %v1010
      %1160 = vmatprep.subr.mxu0 0.0
      %1161 = vmatpush1.msra.mxu0 %v1007
      %1162 = vmatprep.subr.mxu0 0.0
      %1163 = vmatpush2.msra.mxu0 0.0
      %1164 = vmatprep.subr.mxu0 0.0
      %1165 = vmatpush2.msra.mxu0 0.0
      %1166 = vmatprep.subr.mxu0 0.0
      %1167 = vmatpush2.msra.mxu0 0.0
      %1168 = vmatprep.subr.mxu0 0.0
      %1169 = vmatpush2.msra.mxu0 0.0
      %1170 = vmatprep.subr.mxu0 0.0
      %1171 = vmatpush2.msra.mxu0 0.0
      %1172 = vmatprep.subr.mxu0 0.0
      %1173 = vmatpush2.msra.mxu0 0.0
      %1174 = vmatprep.subr.mxu0 0.0
      %1175 = vmatpush2.msra.mxu0 0.0
      %1176 = vmatprep.subr.mxu0 0.0
      %1177 = vmatpush2.msra.mxu0 0.0
      %1178 = vmatprep.subr.mxu0 0.0
      %1179 = vmatpush2.msra.mxu0 0.0
      %1180 = vmatprep.subr.mxu0 0.0
      %1181 = vmatpush2.msra.mxu0 0.0
      %1182 = vmatprep.subr.mxu0 0.0
      %1183 = vmatpush2.msra.mxu0 0.0
      %1184 = vmatprep.subr.mxu0 0.0
      %1185 = vmatpush2.msra.mxu0 0.0
      %1186 = vmatprep.subr.mxu0 0.0
      %1187 = vmatpush2.msra.mxu0 0.0
      %1188 = vmatprep.subr.mxu0 0.0
      %1189 = vmatpush2.msra.mxu0 0.0
      %1190 = vmatprep.subr.mxu0 0.0
      %1191 = vmatpush2.msra.mxu0 0.0
      %1192 = vmatprep.subr.mxu0 0.0
      %1193 = vmatpush2.msra.mxu0 0.0
      %1194 = vmatprep.mubr.f32.mxu0 0.0
      %1195 = vmatmul.mubr.f32.gmra.mxu0 %v996
      %v1196 = vpop.f32.mrf.mxu0
      %v1197 = vadd.f32 0.0, %v1196
      %v1198 = vpop.f32.mrf.mxu0
      %1199 = vmatprep.mubr.f32.mxu0 0.0
      %1200 = vmatmul.mubr.f32.gmra.mxu0 %v997
      %v1201 = vpop.f32.mrf.mxu0
      %v1202 = vadd.f32 0.0, %v1201
      %v1203 = vpop.f32.mrf.mxu0
      %1204 = vdwg.mxu0
      %v1205 = vrot.slane %v1120, 7
      %v1206 = vrot.slane %v1126, 7
      %v1207 = vsel %vm622, %v1205, %v1206
      %v1208 = vsel %vm622, %v1206, %v1205
      %v1209 = vsel %vm627, %v1208, 0.0
      %v1210 = vsel %vm628, %v1207, 0.0
      %v1211 = vadd.f32 %v1122, %v1209
      %v1212 = vadd.f32 %v1128, %v1210
      %v1213 = vrot.slane %v1197, 1
      %v1214 = vrot.slane %v1202, 1
      %v1215 = vsel %vm635, %v1213, %v1214
      %v1216 = vsel %vm635, %v1214, %v1213
      %v1217 = vsel %vm640, %v1215, 0.0
      %v1218 = vsel %vm641, %v1216, 0.0
      %v1219 = vadd.f32 %v1211, %v1217
      %v1220 = vadd.f32 %v1212, %v1218
      %v1221 = vadd.f32 %v1219, %v1003
      %v1222 = vadd.f32 %v1220, %v1003
      %v1223 = vmax.f32 %v1221, 0.0
      %v1224 = vmax.f32 %v1222, 0.0
      %v1225 = vadd.f32 %v996, %v1223
      %v1226 = vadd.f32 %v997, %v1224
      %1227 = vmatprep.subr.mxu0 %v1051
      %1228 = vmatpush1.msra.mxu0 %v1050
      %1229 = vmatprep.subr.mxu0 %v1048
      %1230 = vmatpush1.msra.mxu0 %v1047
      %1231 = vmatprep.subr.mxu0 %v1045
      %1232 = vmatpush1.msra.mxu0 %v1044
      %1233 = vmatprep.subr.mxu0 %v1042
      %1234 = vmatpush1.msra.mxu0 %v1041
      %1235 = vmatprep.subr.mxu0 %v1039
      %1236 = vmatpush1.msra.mxu0 %v1038
      %1237 = vmatprep.subr.mxu0 %v1036
      %1238 = vmatpush1.msra.mxu0 %v1035
      %1239 = vmatprep.subr.mxu0 %v1033
      %1240 = vmatpush1.msra.mxu0 %v1032
      %1241 = vmatprep.subr.mxu0 %v1030
      %1242 = vmatpush1.msra.mxu0 %v1029
      %1243 = vmatprep.subr.mxu0 %v1027
      %1244 = vmatpush1.msra.mxu0 %v1026
      %1245 = vmatprep.subr.mxu0 %v1024
      %1246 = vmatpush1.msra.mxu0 %v1023
      %1247 = vmatprep.subr.mxu0 %v1021
      %1248 = vmatpush1.msra.mxu0 %v1020
      %1249 = vmatprep.subr.mxu0 %v1018
      %1250 = vmatpush1.msra.mxu0 %v1017
      %1251 = vmatprep.subr.mxu0 %v1015
      %1252 = vmatpush1.msra.mxu0 %v1014
      %1253 = vmatprep.subr.mxu0 %v1012
      %1254 = vmatpush1.msra.mxu0 %v1011
      %1255 = vmatprep.subr.mxu0 %v1009
      %1256 = vmatpush1.msra.mxu0 %v1008
      %1257 = vmatprep.subr.mxu0 %v1006
      %1258 = vmatpush1.msra.mxu0 %v1005
      %1259 = vmatprep.subr.mxu0 0.0
      %1260 = vmatpush2.msra.mxu0 0.0
      %1261 = vmatprep.subr.mxu0 0.0
      %1262 = vmatpush2.msra.mxu0 0.0
      %1263 = vmatprep.subr.mxu0 0.0
      %1264 = vmatpush2.msra.mxu0 0.0
      %1265 = vmatprep.subr.mxu0 0.0
      %1266 = vmatpush2.msra.mxu0 0.0
      %1267 = vmatprep.subr.mxu0 0.0
      %1268 = vmatpush2.msra.mxu0 0.0
      %1269 = vmatprep.subr.mxu0 0.0
      %1270 = vmatpush2.msra.mxu0 0.0
      %1271 = vmatprep.subr.mxu0 0.0
      %1272 = vmatpush2.msra.mxu0 0.0
      %1273 = vmatprep.subr.mxu0 0.0
      %1274 = vmatpush2.msra.mxu0 0.0
      %1275 = vmatprep.subr.mxu0 0.0
      %1276 = vmatpush2.msra.mxu0 0.0
      %1277 = vmatprep.subr.mxu0 0.0
      %1278 = vmatpush2.msra.mxu0 0.0
      %1279 = vmatprep.subr.mxu0 0.0
      %1280 = vmatpush2.msra.mxu0 0.0
      %1281 = vmatprep.subr.mxu0 0.0
      %1282 = vmatpush2.msra.mxu0 0.0
      %1283 = vmatprep.subr.mxu0 0.0
      %1284 = vmatpush2.msra.mxu0 0.0
      %1285 = vmatprep.subr.mxu0 0.0
      %1286 = vmatpush2.msra.mxu0 0.0
      %1287 = vmatprep.subr.mxu0 0.0
      %1288 = vmatpush2.msra.mxu0 0.0
      %1289 = vmatprep.subr.mxu0 0.0
      %1290 = vmatpush2.msra.mxu0 0.0
      %1291 = vmatprep.mubr.f32.mxu0 0.0
      %1292 = vmatmul.mubr.f32.gmra.mxu0 %v1225
      %v1293 = vpop.f32.mrf.mxu0
      %v1294 = vadd.f32 0.0, %v1293
      %v1295 = vpop.f32.mrf.mxu0
      %v1296 = vadd.f32 0.0, %v1295
      %1297 = vmatprep.mubr.f32.mxu0 0.0
      %1298 = vmatmul.mubr.f32.gmra.mxu0 %v1226
      %v1299 = vpop.f32.mrf.mxu0
      %v1300 = vadd.f32 0.0, %v1299
      %v1301 = vpop.f32.mrf.mxu0
      %v1302 = vadd.f32 0.0, %v1301
      %1303 = vdwg.mxu0
      %1304 = vmatprep.subr.mxu0 0.0
      %1305 = vmatpush1.msra.mxu0 %v1052
      %1306 = vmatprep.subr.mxu0 0.0
      %1307 = vmatpush1.msra.mxu0 %v1049
      %1308 = vmatprep.subr.mxu0 0.0
      %1309 = vmatpush1.msra.mxu0 %v1046
      %1310 = vmatprep.subr.mxu0 0.0
      %1311 = vmatpush1.msra.mxu0 %v1043
      %1312 = vmatprep.subr.mxu0 0.0
      %1313 = vmatpush1.msra.mxu0 %v1040
      %1314 = vmatprep.subr.mxu0 0.0
      %1315 = vmatpush1.msra.mxu0 %v1037
      %1316 = vmatprep.subr.mxu0 0.0
      %1317 = vmatpush1.msra.mxu0 %v1034
      %1318 = vmatprep.subr.mxu0 0.0
      %1319 = vmatpush1.msra.mxu0 %v1031
      %1320 = vmatprep.subr.mxu0 0.0
      %1321 = vmatpush1.msra.mxu0 %v1028
      %1322 = vmatprep.subr.mxu0 0.0
      %1323 = vmatpush1.msra.mxu0 %v1025
      %1324 = vmatprep.subr.mxu0 0.0
      %1325 = vmatpush1.msra.mxu0 %v1022
      %1326 = vmatprep.subr.mxu0 0.0
      %1327 = vmatpush1.msra.mxu0 %v1019
      %1328 = vmatprep.subr.mxu0 0.0
      %1329 = vmatpush1.msra.mxu0 %v1016
      %1330 = vmatprep.subr.mxu0 0.0
      %1331 = vmatpush1.msra.mxu0 %v1013
      %1332 = vmatprep.subr.mxu0 0.0
      %1333 = vmatpush1.msra.mxu0 %v1010
      %1334 = vmatprep.subr.mxu0 0.0
      %1335 = vmatpush1.msra.mxu0 %v1007
      %1336 = vmatprep.subr.mxu0 0.0
      %1337 = vmatpush2.msra.mxu0 0.0
      %1338 = vmatprep.subr.mxu0 0.0
      %1339 = vmatpush2.msra.mxu0 0.0
      %1340 = vmatprep.subr.mxu0 0.0
      %1341 = vmatpush2.msra.mxu0 0.0
      %1342 = vmatprep.subr.mxu0 0.0
      %1343 = vmatpush2.msra.mxu0 0.0
      %1344 = vmatprep.subr.mxu0 0.0
      %1345 = vmatpush2.msra.mxu0 0.0
      %1346 = vmatprep.subr.mxu0 0.0
      %1347 = vmatpush2.msra.mxu0 0.0
      %1348 = vmatprep.subr.mxu0 0.0
      %1349 = vmatpush2.msra.mxu0 0.0
      %1350 = vmatprep.subr.mxu0 0.0
      %1351 = vmatpush2.msra.mxu0 0.0
      %1352 = vmatprep.subr.mxu0 0.0
      %1353 = vmatpush2.msra.mxu0 0.0
      %1354 = vmatprep.subr.mxu0 0.0
      %1355 = vmatpush2.msra.mxu0 0.0
      %1356 = vmatprep.subr.mxu0 0.0
      %1357 = vmatpush2.msra.mxu0 0.0
      %1358 = vmatprep.subr.mxu0 0.0
      %1359 = vmatpush2.msra.mxu0 0.0
      %1360 = vmatprep.subr.mxu0 0.0
      %1361 = vmatpush2.msra.mxu0 0.0
      %1362 = vmatprep.subr.mxu0 0.0
      %1363 = vmatpush2.msra.mxu0 0.0
      %1364 = vmatprep.subr.mxu0 0.0
      %1365 = vmatpush2.msra.mxu0 0.0
      %1366 = vmatprep.subr.mxu0 0.0
      %1367 = vmatpush2.msra.mxu0 0.0
      %1368 = vmatprep.mubr.f32.mxu0 0.0
      %1369 = vmatmul.mubr.f32.gmra.mxu0 %v1225
      %v1370 = vpop.f32.mrf.mxu0
      %v1371 = vadd.f32 0.0, %v1370
      %v1372 = vpop.f32.mrf.mxu0
      %1373 = vmatprep.mubr.f32.mxu0 0.0
      %1374 = vmatmul.mubr.f32.gmra.mxu0 %v1226
      %v1375 = vpop.f32.mrf.mxu0
      %v1376 = vadd.f32 0.0, %v1375
      %v1377 = vpop.f32.mrf.mxu0
      %1378 = vdwg.mxu0
      %v1379 = vrot.slane %v1294, 7
      %v1380 = vrot.slane %v1300, 7
      %v1381 = vsel %vm622, %v1379, %v1380
      %v1382 = vsel %vm622, %v1380, %v1379
      %v1383 = vsel %vm627, %v1382, 0.0
      %v1384 = vsel %vm628, %v1381, 0.0
      %v1385 = vadd.f32 %v1296, %v1383
      %v1386 = vadd.f32 %v1302, %v1384
      %v1387 = vrot.slane %v1371, 1
      %v1388 = vrot.slane %v1376, 1
      %v1389 = vsel %vm635, %v1387, %v1388
      %v1390 = vsel %vm635, %v1388, %v1387
      %v1391 = vsel %vm640, %v1389, 0.0
      %v1392 = vsel %vm641, %v1390, 0.0
      %v1393 = vadd.f32 %v1385, %v1391
      %v1394 = vadd.f32 %v1386, %v1392
      %v1395 = vadd.f32 %v1393, %v1003
      %v1396 = vadd.f32 %v1394, %v1003
      %v1397 = vmax.f32 %v1395, 0.0
      %v1398 = vmax.f32 %v1396, 0.0
      %v1399 = vadd.f32 %v996, %v1397
      %v1400 = vadd.f32 %v997, %v1398
      %1401 = vmatprep.subr.mxu0 %v1051
      %1402 = vmatpush1.msra.mxu0 %v1050
      %1403 = vmatprep.subr.mxu0 %v1048
      %1404 = vmatpush1.msra.mxu0 %v1047
      %1405 = vmatprep.subr.mxu0 %v1045
      %1406 = vmatpush1.msra.mxu0 %v1044
      %1407 = vmatprep.subr.mxu0 %v1042
      %1408 = vmatpush1.msra.mxu0 %v1041
      %1409 = vmatprep.subr.mxu0 %v1039
      %1410 = vmatpush1.msra.mxu0 %v1038
      %1411 = vmatprep.subr.mxu0 %v1036
      %1412 = vmatpush1.msra.mxu0 %v1035
      %1413 = vmatprep.subr.mxu0 %v1033
      %1414 = vmatpush1.msra.mxu0 %v1032
      %1415 = vmatprep.subr.mxu0 %v1030
      %1416 = vmatpush1.msra.mxu0 %v1029
      %1417 = vmatprep.subr.mxu0 %v1027
      %1418 = vmatpush1.msra.mxu0 %v1026
      %1419 = vmatprep.subr.mxu0 %v1024
      %1420 = vmatpush1.msra.mxu0 %v1023
      %1421 = vmatprep.subr.mxu0 %v1021
      %1422 = vmatpush1.msra.mxu0 %v1020
      %1423 = vmatprep.subr.mxu0 %v1018
      %1424 = vmatpush1.msra.mxu0 %v1017
      %1425 = vmatprep.subr.mxu0 %v1015
      %1426 = vmatpush1.msra.mxu0 %v1014
      %1427 = vmatprep.subr.mxu0 %v1012
      %1428 = vmatpush1.msra.mxu0 %v1011
      %1429 = vmatprep.subr.mxu0 %v1009
      %1430 = vmatpush1.msra.mxu0 %v1008
      %1431 = vmatprep.subr.mxu0 %v1006
      %1432 = vmatpush1.msra.mxu0 %v1005
      %1433 = vmatprep.subr.mxu0 0.0
      %1434 = vmatpush2.msra.mxu0 0.0
      %1435 = vmatprep.subr.mxu0 0.0
      %1436 = vmatpush2.msra.mxu0 0.0
      %1437 = vmatprep.subr.mxu0 0.0
      %1438 = vmatpush2.msra.mxu0 0.0
      %1439 = vmatprep.subr.mxu0 0.0
      %1440 = vmatpush2.msra.mxu0 0.0
      %1441 = vmatprep.subr.mxu0 0.0
      %1442 = vmatpush2.msra.mxu0 0.0
      %1443 = vmatprep.subr.mxu0 0.0
      %1444 = vmatpush2.msra.mxu0 0.0
      %1445 = vmatprep.subr.mxu0 0.0
      %1446 = vmatpush2.msra.mxu0 0.0
      %1447 = vmatprep.subr.mxu0 0.0
      %1448 = vmatpush2.msra.mxu0 0.0
      %1449 = vmatprep.subr.mxu0 0.0
      %1450 = vmatpush2.msra.mxu0 0.0
      %1451 = vmatprep.subr.mxu0 0.0
      %1452 = vmatpush2.msra.mxu0 0.0
      %1453 = vmatprep.subr.mxu0 0.0
      %1454 = vmatpush2.msra.mxu0 0.0
      %1455 = vmatprep.subr.mxu0 0.0
      %1456 = vmatpush2.msra.mxu0 0.0
      %1457 = vmatprep.subr.mxu0 0.0
      %1458 = vmatpush2.msra.mxu0 0.0
      %1459 = vmatprep.subr.mxu0 0.0
      %1460 = vmatpush2.msra.mxu0 0.0
      %1461 = vmatprep.subr.mxu0 0.0
      %1462 = vmatpush2.msra.mxu0 0.0
      %1463 = vmatprep.subr.mxu0 0.0
      %1464 = vmatpush2.msra.mxu0 0.0
      %1465 = vmatprep.mubr.f32.mxu0 0.0
      %1466 = vmatmul.mubr.f32.gmra.mxu0 %v1399
      %v1467 = vpop.f32.mrf.mxu0
      %v1468 = vadd.f32 0.0, %v1467
      %v1469 = vpop.f32.mrf.mxu0
      %v1470 = vadd.f32 0.0, %v1469
      %1471 = vmatprep.mubr.f32.mxu0 0.0
      %1472 = vmatmul.mubr.f32.gmra.mxu0 %v1400
      %v1473 = vpop.f32.mrf.mxu0
      %v1474 = vadd.f32 0.0, %v1473
      %v1475 = vpop.f32.mrf.mxu0
      %v1476 = vadd.f32 0.0, %v1475
      %1477 = vdwg.mxu0
      %1478 = vmatprep.subr.mxu0 0.0
      %1479 = vmatpush1.msra.mxu0 %v1052
      %1480 = vmatprep.subr.mxu0 0.0
      %1481 = vmatpush1.msra.mxu0 %v1049
      %1482 = vmatprep.subr.mxu0 0.0
      %1483 = vmatpush1.msra.mxu0 %v1046
      %1484 = vmatprep.subr.mxu0 0.0
      %1485 = vmatpush1.msra.mxu0 %v1043
      %1486 = vmatprep.subr.mxu0 0.0
      %1487 = vmatpush1.msra.mxu0 %v1040
      %1488 = vmatprep.subr.mxu0 0.0
      %1489 = vmatpush1.msra.mxu0 %v1037
      %1490 = vmatprep.subr.mxu0 0.0
      %1491 = vmatpush1.msra.mxu0 %v1034
      %1492 = vmatprep.subr.mxu0 0.0
      %1493 = vmatpush1.msra.mxu0 %v1031
      %1494 = vmatprep.subr.mxu0 0.0
      %1495 = vmatpush1.msra.mxu0 %v1028
      %1496 = vmatprep.subr.mxu0 0.0
      %1497 = vmatpush1.msra.mxu0 %v1025
      %1498 = vmatprep.subr.mxu0 0.0
      %1499 = vmatpush1.msra.mxu0 %v1022
      %1500 = vmatprep.subr.mxu0 0.0
      %1501 = vmatpush1.msra.mxu0 %v1019
      %1502 = vmatprep.subr.mxu0 0.0
      %1503 = vmatpush1.msra.mxu0 %v1016
      %1504 = vmatprep.subr.mxu0 0.0
      %1505 = vmatpush1.msra.mxu0 %v1013
      %1506 = vmatprep.subr.mxu0 0.0
      %1507 = vmatpush1.msra.mxu0 %v1010
      %1508 = vmatprep.subr.mxu0 0.0
      %1509 = vmatpush1.msra.mxu0 %v1007
      %1510 = vmatprep.subr.mxu0 0.0
      %1511 = vmatpush2.msra.mxu0 0.0
      %1512 = vmatprep.subr.mxu0 0.0
      %1513 = vmatpush2.msra.mxu0 0.0
      %1514 = vmatprep.subr.mxu0 0.0
      %1515 = vmatpush2.msra.mxu0 0.0
      %1516 = vmatprep.subr.mxu0 0.0
      %1517 = vmatpush2.msra.mxu0 0.0
      %1518 = vmatprep.subr.mxu0 0.0
      %1519 = vmatpush2.msra.mxu0 0.0
      %1520 = vmatprep.subr.mxu0 0.0
      %1521 = vmatpush2.msra.mxu0 0.0
      %1522 = vmatprep.subr.mxu0 0.0
      %1523 = vmatpush2.msra.mxu0 0.0
      %1524 = vmatprep.subr.mxu0 0.0
      %1525 = vmatpush2.msra.mxu0 0.0
      %1526 = vmatprep.subr.mxu0 0.0
      %1527 = vmatpush2.msra.mxu0 0.0
      %1528 = vmatprep.subr.mxu0 0.0
      %1529 = vmatpush2.msra.mxu0 0.0
      %1530 = vmatprep.subr.mxu0 0.0
      %1531 = vmatpush2.msra.mxu0 0.0
      %1532 = vmatprep.subr.mxu0 0.0
      %1533 = vmatpush2.msra.mxu0 0.0
      %1534 = vmatprep.subr.mxu0 0.0
      %1535 = vmatpush2.msra.mxu0 0.0
      %1536 = vmatprep.subr.mxu0 0.0
      %1537 = vmatpush2.msra.mxu0 0.0
      %1538 = vmatprep.subr.mxu0 0.0
      %1539 = vmatpush2.msra.mxu0 0.0
      %1540 = vmatprep.subr.mxu0 0.0
      %1541 = vmatpush2.msra.mxu0 0.0
      %1542 = vmatprep.mubr.f32.mxu0 0.0
      %1543 = vmatmul.mubr.f32.gmra.mxu0 %v1399
      %v1544 = vpop.f32.mrf.mxu0
      %v1545 = vadd.f32 0.0, %v1544
      %v1546 = vpop.f32.mrf.mxu0
      %1547 = vmatprep.mubr.f32.mxu0 0.0
      %1548 = vmatmul.mubr.f32.gmra.mxu0 %v1400
      %v1549 = vpop.f32.mrf.mxu0
      %v1550 = vadd.f32 0.0, %v1549
      %v1551 = vpop.f32.mrf.mxu0
      %1552 = vdwg.mxu0
      %v1553 = vrot.slane %v1468, 7
      %v1554 = vrot.slane %v1474, 7
      %v1555 = vsel %vm622, %v1553, %v1554
      %v1556 = vsel %vm622, %v1554, %v1553
      %v1557 = vsel %vm627, %v1556, 0.0
      %v1558 = vsel %vm628, %v1555, 0.0
      %v1559 = vadd.f32 %v1470, %v1557
      %v1560 = vadd.f32 %v1476, %v1558
      %v1561 = vrot.slane %v1545, 1
      %v1562 = vrot.slane %v1550, 1
      %v1563 = vsel %vm635, %v1561, %v1562
      %v1564 = vsel %vm635, %v1562, %v1561
      %v1565 = vsel %vm640, %v1563, 0.0
      %v1566 = vsel %vm641, %v1564, 0.0
      %v1567 = vadd.f32 %v1559, %v1565
      %v1568 = vadd.f32 %v1560, %v1566
      %v1569 = vadd.f32 %v1567, %v1003
      %v1570 = vadd.f32 %v1568, %v1003
      %v1571 = vmax.f32 %v1569, 0.0
      %v1572 = vmax.f32 %v1570, 0.0
      %v1573 = vadd.f32 %v405, %v1571
      %v1574 = vadd.f32 %v410, %v1572
      %1575 = vst [vmem:[%s280] sm:$0xff] %v1573
      %1576 = vst [vmem:[%s280 + $0x8] sm:$0xff] %v1574
      %s1577 = smul.u32 2, %s18
      %p1578 = scmp.lt.s32.totalorder %s1577, 3
      %s1579 = scalar_select %p1578, %s1577, 3
      %s1580 = smul.addr %s1579, 8
      %s1581 = scalar_lea.vmem %s7, %s1580
      // Predicated region
      $region49: #{rrcnn_block_apply.1} parent=47 // pred_check
        %p1582 = pneg %p188
      $region50: #{rrcnn_block_apply.1} parent=47 // pred_check_branch
        %1584 = sbr.rel (%p1582) target = $region52
      $region51: #{rrcnn_block_apply.1} parent=47 // pred_region
        %s1585 = smul.u32 2, %s18
      $region52: #{rrcnn_block_apply.1} parent=47 // pred_fallthru
        _
    $region48: #{rrcnn_block_apply.1} parent=5 // pred_fallthru
      _
    %p1586 = scmp.le.s32.totalorder 2, %s13
    // Predicated region
    $region53: #{rrcnn_block_apply.1} parent=5 // pred_check
      %p1587 = pneg %p1586
    $region54: #{rrcnn_block_apply.1} parent=5 // pred_check_branch
      %1589 = sbr.rel (%p1587) target = $region56
    $region55: #{rrcnn_block_apply.1} parent=5 // pred_region
      %s1590 = ssub.s32 %s13, 2
      // Predicated region
      $region57: #{rrcnn_block_apply.1} parent=55 // pred_check
        %p1591 = pneg %p194
      $region58: #{rrcnn_block_apply.1} parent=55 // pred_check_branch
        %1593 = sbr.rel (%p1591) target = $region60
      $region59: #{rrcnn_block_apply.1} parent=55 // pred_region
        %s1594 = smul.u32 2, %s19
        %p1595 = scmp.lt.s32.totalorder %s1594, 3
        %s1596 = scalar_select %p1595, %s1594, 3
        %s1597 = smul.addr %s1596, 8
        %s1598 = scalar_lea.vmem %s7, %s1597
      $region60: #{rrcnn_block_apply.1} parent=55 // pred_fallthru
        _
    $region56: #{rrcnn_block_apply.1} parent=5 // pred_fallthru
      _
  $region6: #{rrcnn_block_apply.1} parent=0 // loop_footer
    %s17 = sadd.s32 1, %s13
  $region7: #{rrcnn_block_apply.1} parent=0 // loop_footer_branch
    %12 = sbr.rel target = $region3
  $region8: #{rrcnn_block_apply.1} parent=0 // loop_exit
    _

</llo_original>
